<compile_context>
chip_gen: v5e
topology: v5e:2x2
jax: 0.10.0
libtpu: 0.0.40
codegen_flags: <defaults>
</compile_context>

<pallas_src>
import math
from functools import partial

import jax
import jax.numpy as jnp
from jax.experimental import pallas as pl
from jax.experimental.pallas import tpu as pltpu

KH, KW = 4, 2          # conv kernel (pkts axis, fields axis)
HP = 128               # lane-padded LSTM hidden size per gate (real hidden <= HP)
NC_PAD = 128           # lane-padded number of classes for a dense output store


# -----------------------------------------------------------------------------
# Fused forward kernel (one grid point per batch block of BB rows)
# -----------------------------------------------------------------------------
def _fused_forward_kernel(BB, T, W1, H1,
                          p1_ref, w1_ref, w2_ref, wih_ref, whh_ref,
                          fc1w_ref, fcw_ref, pv_ref, o_ref):
    C1 = w1_ref.shape[1]
    C2 = w2_ref.shape[2]
    W2 = wih_ref.shape[0]
    F1 = fc1w_ref.shape[1]
    NCp = fcw_ref.shape[1]
    HB = H1 * BB
    TB = T * BB

    # [R5] packed small parameters: one VMEM slab, sliced per row in-register.
    pv = pv_ref[...]
    c1b, s1, t1 = pv[0:1, :C1], pv[1:2, :C1], pv[2:3, :C1]
    c2b, s2, t2 = pv[3:4, :C2], pv[4:5, :C2], pv[5:6, :C2]
    lstm_b = pv[6:7, :]                     # (1, 4*HP)
    fc1b = pv[7:8, :F1]
    fcb = pv[8:9, :NCp]

    # ---- conv1 + ReLU + BN1: ONE matmul + ONE fused elementwise pass [R1] ----
    a1 = jnp.dot(p1_ref[...], w1_ref[...], preferred_element_type=jnp.float32)
    y1 = (jnp.maximum(a1 + c1b, 0.0) * s1 + t1).reshape(W1, HB, C1)   # f32

    # ---- conv2 + ReLU + BN2 via tap K-accumulation (all W2 columns) [R2,R3] --
    # tap (dh, dw): rows ordered (w2, t, b); slice offsets dh*BB are 8-aligned.
    w2c = w2_ref[...]                       # (KH*KW, C1, C2) f32
    acc2 = jnp.zeros((W2 * TB, C2), jnp.float32)
    for dh in range(KH):
        for dw in range(KW):
            sl = y1[dw:dw + W2, dh * BB:dh * BB + TB, :].reshape(W2 * TB, C1)
            acc2 = acc2 + jnp.dot(sl, w2c[dh * KW + dw],
                                  preferred_element_type=jnp.float32)
    y2 = (jnp.maximum(acc2 + c2b, 0.0) * s2 + t2).astype(jnp.bfloat16)  # [R4]
    y2 = y2.reshape(W2, TB, C2)

    # ---- hoisted LSTM input projection: xp[t*BB+b] = x_t @ Wih (+ biases) ----
    wih = wih_ref[...]                      # (W2, C2, 4*HP) bf16
    xp = jnp.zeros((TB, 4 * HP), jnp.float32)
    for w2 in range(W2):
        xp = xp + jnp.dot(y2[w2], wih[w2], preferred_element_type=jnp.float32)
    xp = xp + lstm_b                        # b_ih + b_hh, gate-padded

    # ---- LSTM recurrence (PyTorch gate order i, f, g, o) [R8/R9] -------------
    # Gates lane-padded to HP=128 each -> 128-aligned slices; padded hidden
    # columns stay exactly zero (zero h/c init + zero-padded wih/whh/bias).
    whh = whh_ref[...]                      # (HP, 4*HP) bf16
    h = jnp.zeros((BB, HP), jnp.float32)
    c = jnp.zeros((BB, HP), jnp.float32)
    for t in range(T):
        g = xp[t * BB:(t + 1) * BB, :] + jnp.dot(
            h.astype(jnp.bfloat16), whh, preferred_element_type=jnp.float32)
        i_g = jax.nn.sigmoid(g[:, 0 * HP:1 * HP])
        f_g = jax.nn.sigmoid(g[:, 1 * HP:2 * HP])
        g_g = jnp.tanh(g[:, 2 * HP:3 * HP])
        o_g = jax.nn.sigmoid(g[:, 3 * HP:4 * HP])
        c = f_g * c + i_g * g_g
        h = o_g * jnp.tanh(c)

    # ---- head: tanh -> (dropout=id) -> fc1 -> ReLU -> (dropout=id) -> fc -----
    feat = jnp.tanh(h)
    feat = jnp.dot(feat.astype(jnp.bfloat16), fc1w_ref[...],
                   preferred_element_type=jnp.float32) + fc1b
    feat = jnp.maximum(feat, 0.0)
    # [R6] full (BB, 128) lane-dense store; wrapper slices back to (B, NC).
    o_ref[...] = jnp.dot(feat.astype(jnp.bfloat16), fcw_ref[...],
                         preferred_element_type=jnp.float32) + fcb


# -----------------------------------------------------------------------------
# Wrapper (plain-JAX glue on the raw input only)
# -----------------------------------------------------------------------------
def _build_conv1_patches(x, BB):
    """x: (B, C, H, W) NCHW -> (NB, W1*H1*BB, C*KH*KW).

    Row order inside a batch block: (w1, h1, b); column order: (c, dh, dw),
    matching conv1_w.reshape(C1, -1).T.  Batch is zero-padded to NB*BB. [R3]
    """
    B, C, H, W = x.shape
    Ho, Wo = H - KH + 1, W - KW + 1
    NB = (B + BB - 1) // BB
    xp = jnp.pad(x, ((0, NB * BB - B), (0, 0), (0, 0), (0, 0)))
    cols = [xp[:, :, dh:dh + Ho, dw:dw + Wo]
            for dh in range(KH) for dw in range(KW)]            # (Bp,C,Ho,Wo) each
    p = jnp.stack(cols, axis=-1)                                # (Bp,C,Ho,Wo,KH*KW)
    p = p.transpose(3, 2, 0, 1, 4)                              # (Wo,Ho,Bp,C,KH*KW)
    p = p.reshape(Wo, Ho, NB, BB, C * KH * KW)
    p = p.transpose(2, 0, 1, 3, 4).reshape(NB, Wo * Ho * BB, C * KH * KW)
    return p


def lopez17_forward(x, pp, *, num_classes, block_batch=8):
    assert block_batch % 8 == 0
    B, _, H, W = x.shape
    BB = block_batch
    H1, W1 = H - KH + 1, W - KW + 1
    T = H1 - KH + 1                                   # sequence length after conv2

    p1 = _build_conv1_patches(x, BB).astype(jnp.bfloat16)   # (NB, W1*H1*BB, Cin*KH*KW)
    NB, RW, K1 = p1.shape

    out = pl.pallas_call(
        partial(_fused_forward_kernel, BB, T, W1, H1),
        out_shape=jax.ShapeDtypeStruct((NB, BB, NC_PAD), jnp.float32),
        grid=(NB,),                                   # [R7] batch-block grid
        in_specs=[
            pl.BlockSpec((None, RW, K1), lambda nb: (nb, 0, 0)),
            pl.BlockSpec(pp["conv1_w"].shape, lambda nb: (0, 0)),
            pl.BlockSpec(pp["conv2_w"].shape, lambda nb: (0, 0, 0)),
            pl.BlockSpec(pp["lstm_wih"].shape, lambda nb: (0, 0, 0)),
            pl.BlockSpec(pp["lstm_whh"].shape, lambda nb: (0, 0)),
            pl.BlockSpec(pp["fc1_w"].shape, lambda nb: (0, 0)),
            pl.BlockSpec(pp["fc_w"].shape, lambda nb: (0, 0)),
            pl.BlockSpec(pp["pvec"].shape, lambda nb: (0, 0)),
        ],
        out_specs=pl.BlockSpec((None, BB, NC_PAD), lambda nb: (nb, 0, 0)),
        compiler_params=pltpu.CompilerParams(
            dimension_semantics=("parallel",),        # [R7] 2 TCs on v7x
            vmem_limit_bytes=32 * 1024 * 1024),       # [R7] safe on 64 MiB v7x
    )(p1, pp["conv1_w"], pp["conv2_w"], pp["lstm_wih"], pp["lstm_whh"],
      pp["fc1_w"], pp["fc_w"], pp["pvec"])

    return out.reshape(NB * BB, NC_PAD)[:B, :num_classes]


# -----------------------------------------------------------------------------
# Parameter creation (PyTorch-like layouts) and one-time preparation/folding
# -----------------------------------------------------------------------------
def init_params(key, *, in_channels, num_pkts, num_fields,
                out_features_size, num_classes, scale):
    del num_pkts
    filters = [math.ceil(32 * scale), math.ceil(64 * scale)]
    hidden = max(math.ceil(100 * scale), 50)
    C1, C2 = filters
    feat1 = num_fields - 2 * (KW - 1)          # 'valid' padding, two convs on field axis
    lstm_in = feat1 * C2

    ks = jax.random.split(key, 20)

    def u(k, shape, fan):
        lim = 1.0 / math.sqrt(fan)
        return jax.random.uniform(k, shape, jnp.float32, -lim, lim)

    return {
        "conv1_w": u(ks[0], (C1, in_channels, KH, KW), in_channels * KH * KW),
        "conv1_b": u(ks[1], (C1,), in_channels * KH * KW),
        "bn1_g": 1.0 + 0.1 * jax.random.normal(ks[2], (C1,), jnp.float32),
        "bn1_b": 0.1 * jax.random.normal(ks[3], (C1,), jnp.float32),
        "bn1_m": 0.1 * jax.random.normal(ks[4], (C1,), jnp.float32),
        "bn1_v": 1.0 + 0.1 * jax.random.uniform(ks[5], (C1,), jnp.float32),
        "conv2_w": u(ks[6], (C2, C1, KH, KW), C1 * KH * KW),
        "conv2_b": u(ks[7], (C2,), C1 * KH * KW),
        "bn2_g": 1.0 + 0.1 * jax.random.normal(ks[8], (C2,), jnp.float32),
        "bn2_b": 0.1 * jax.random.normal(ks[9], (C2,), jnp.float32),
        "bn2_m": 0.1 * jax.random.normal(ks[10], (C2,), jnp.float32),
        "bn2_v": 1.0 + 0.1 * jax.random.uniform(ks[11], (C2,), jnp.float32),
        # LSTM (PyTorch layouts, gate order i, f, g, o)
        "lstm_wih": u(ks[12], (4 * hidden, lstm_in), hidden),
        "lstm_whh": u(ks[13], (4 * hidden, hidden), hidden),
        "lstm_bih": u(ks[14], (4 * hidden,), hidden),
        "lstm_bhh": u(ks[15], (4 * hidden,), hidden),
        "fc1_w": u(ks[16], (out_features_size, hidden), hidden),
        "fc1_b": u(ks[17], (out_features_size,), hidden),
        "fc_w": u(ks[18], (num_classes, out_features_size), out_features_size),
        "fc_b": u(ks[19], (num_classes,), out_features_size),
    }


def prepare_params(raw, *, num_fields, eps=1e-5):
    """Fold BN, reshape conv weights, concat/pad LSTM gates, pack small vectors."""
    C1 = raw["conv1_w"].shape[0]
    C2 = raw["conv2_w"].shape[0]
    W2 = num_fields - 2 * (KW - 1)
    hd = raw["lstm_whh"].shape[1]
    F1 = raw["fc1_w"].shape[0]
    NC = raw["fc_w"].shape[0]
    assert hd <= HP and NC <= NC_PAD and max(C1, C2, F1, NC) <= 4 * HP
    pad = HP - hd

    def bn_fold(g, b, m, v):
        s = g * jax.lax.rsqrt(v + eps)
        return s, b - m * s

    bn1_s, bn1_t = bn_fold(raw["bn1_g"], raw["bn1_b"], raw["bn1_m"], raw["bn1_v"])
    bn2_s, bn2_t = bn_fold(raw["bn2_g"], raw["bn2_b"], raw["bn2_m"], raw["bn2_v"])

    # conv1: (C1, Cin, KH, KW) -> (Cin*KH*KW, C1)  [bf16 operand of the big dot]
    w1 = raw["conv1_w"].reshape(C1, -1).T.astype(jnp.bfloat16)
    # conv2 taps: (C2, C1, KH, KW) -> (KH*KW, C1, C2), kept f32 for K-accumulation
    w2 = raw["conv2_w"].transpose(2, 3, 1, 0).reshape(KH * KW, C1, C2).astype(jnp.float32)

    # LSTM input weights split per field column w2 (feature index = c2*W2 + w2),
    # gates concatenated along lanes with per-gate padding hd -> HP.
    wih = raw["lstm_wih"].reshape(4, hd, C2, W2).transpose(3, 2, 0, 1)  # (W2, C2, 4, hd)
    wih = jnp.pad(wih, ((0, 0), (0, 0), (0, 0), (0, pad)))
    wih = wih.reshape(W2, C2, 4 * HP).astype(jnp.bfloat16)

    whh = raw["lstm_whh"].reshape(4, hd, hd).transpose(2, 0, 1)         # (hd_in, 4, hd_out)
    whh = jnp.pad(whh, ((0, pad), (0, 0), (0, pad)))
    whh = whh.reshape(HP, 4 * HP).astype(jnp.bfloat16)

    lb = (raw["lstm_bih"] + raw["lstm_bhh"]).reshape(4, hd)
    lb = jnp.pad(lb, ((0, 0), (0, pad))).reshape(4 * HP)

    fc1_w = jnp.pad(raw["fc1_w"].T, ((0, pad), (0, 0))).astype(jnp.bfloat16)      # (HP, F1)
    fc_w = jnp.pad(raw["fc_w"].T, ((0, 0), (0, NC_PAD - NC))).astype(jnp.bfloat16)  # (F1, 128)

    # [R5] pack the nine small vectors into one (16, 4*HP) f32 slab.
    P = 4 * HP

    def row(v):
        v = jnp.asarray(v, jnp.float32).reshape(-1)
        return jnp.pad(v, (0, P - v.shape[0]))

    pvec = jnp.stack([
        row(raw["conv1_b"]), row(bn1_s), row(bn1_t),
        row(raw["conv2_b"]), row(bn2_s), row(bn2_t),
        row(lb), row(raw["fc1_b"]), row(raw["fc_b"]),
    ])
    pvec = jnp.pad(pvec, ((0, 16 - pvec.shape[0]), (0, 0)))

    return {"conv1_w": w1, "conv2_w": w2, "lstm_wih": wih, "lstm_whh": whh,
            "fc1_w": fc1_w, "fc_w": fc_w, "pvec": pvec}


# -----------------------------------------------------------------------------
# Pure-JAX f32 reference (mirrors the PyTorch module in eval mode)
# -----------------------------------------------------------------------------
def _reference_forward(x, raw, eps=1e-5):
    dn = ("NCHW", "OIHW", "NCHW")

    def bn(y, g, b, m, v):
        s = (g * jax.lax.rsqrt(v + eps)).reshape(1, -1, 1, 1)
        return (y - m.reshape(1, -1, 1, 1)) * s + b.reshape(1, -1, 1, 1)

    y = jax.lax.conv_general_dilated(x, raw["conv1_w"], (1, 1), "VALID",
                                     dimension_numbers=dn)
    y = jnp.maximum(y + raw["conv1_b"].reshape(1, -1, 1, 1), 0.0)
    y = bn(y, raw["bn1_g"], raw["bn1_b"], raw["bn1_m"], raw["bn1_v"])
    y = jax.lax.conv_general_dilated(y, raw["conv2_w"], (1, 1), "VALID",
                                     dimension_numbers=dn)
    y = jnp.maximum(y + raw["conv2_b"].reshape(1, -1, 1, 1), 0.0)
    y = bn(y, raw["bn2_g"], raw["bn2_b"], raw["bn2_m"], raw["bn2_v"])

    B, C2, H2, W2 = y.shape
    seq = y.transpose(0, 2, 1, 3).reshape(B, H2, C2 * W2)

    hd = raw["lstm_whh"].shape[1]
    wih, whh = raw["lstm_wih"], raw["lstm_whh"]
    bias = raw["lstm_bih"] + raw["lstm_bhh"]
    h = jnp.zeros((B, hd), jnp.float32)
    c = jnp.zeros((B, hd), jnp.float32)
    for t in range(H2):
        g = seq[:, t, :] @ wih.T + h @ whh.T + bias
        i = jax.nn.sigmoid(g[:, 0 * hd:1 * hd])
        f = jax.nn.sigmoid(g[:, 1 * hd:2 * hd])
        gg = jnp.tanh(g[:, 2 * hd:3 * hd])
        o = jax.nn.sigmoid(g[:, 3 * hd:4 * hd])
        c = f * c + i * gg
        h = o * jnp.tanh(c)

    feat = jnp.tanh(h) @ raw["fc1_w"].T + raw["fc1_b"]
    feat = jnp.maximum(feat, 0.0)
    return feat @ raw["fc_w"].T + raw["fc_b"]


# -----------------------------------------------------------------------------
if __name__ == "__main__":
    B, Cin = 2, 1
    num_pkts, num_fields = 10, 6        # 'valid' padding branch -> zero paddings
    num_classes = 10
    out_features_size = 32
    scale = 0.25                        # filters [8, 16], hidden 50

    key = jax.random.PRNGKey(0)
    kx, kp = jax.random.split(key)
    x = jax.random.normal(kx, (B, Cin, num_pkts, num_fields), jnp.float32)
    raw = init_params(kp, in_channels=Cin, num_pkts=num_pkts,
                      num_fields=num_fields,
                      out_features_size=out_features_size,
                      num_classes=num_classes, scale=scale)
    params = prepare_params(raw, num_fields=num_fields)

    fwd = jax.jit(lopez17_forward, static_argnames=("num_classes", "block_batch"))
    out = fwd(x, params, num_classes=num_classes, block_batch=8)
    jax.block_until_ready(out)

    assert out.shape == (B, num_classes), out.shape
    assert bool(jnp.all(jnp.isfinite(out)))

    ref = _reference_forward(x, raw)
    max_err = float(jnp.max(jnp.abs(out - ref)))
    assert bool(jnp.allclose(out, ref, atol=5e-2, rtol=5e-2)), max_err

    print("KERNEL_OK")
</pallas_src>

<mosaic_0001>
module attributes {stable_mosaic.version = 11 : i64} {
  func.func @_fused_forward_kernel(%arg0: i32, %arg1: memref<1x280x8xbf16, #tpu.memory_space<vmem>>, %arg2: memref<8x8xbf16, #tpu.memory_space<vmem>>, %arg3: memref<8x8x16xf32, #tpu.memory_space<vmem>>, %arg4: memref<4x16x512xbf16, #tpu.memory_space<vmem>>, %arg5: memref<128x512xbf16, #tpu.memory_space<vmem>>, %arg6: memref<128x32xbf16, #tpu.memory_space<vmem>>, %arg7: memref<32x128xbf16, #tpu.memory_space<vmem>>, %arg8: memref<16x512xf32, #tpu.memory_space<vmem>>, %arg9: memref<1x8x128xf32, #tpu.memory_space<vmem>>) attributes {dimension_semantics = [#tpu.dimension_semantics<parallel>], iteration_bounds = array<i64: 1>, scalar_prefetch = 0 : i64, scratch_operands = 0 : i64, tpu.core_type = #tpu.core_type<tc>, window_params = [{transform_indices = @transform_0, window_bounds = array<i64: 1, 280, 8>}, {pipeline_mode = #tpu.pipeline_mode<synchronous>, transform_indices = @transform_1, window_bounds = array<i64: 8, 8>}, {pipeline_mode = #tpu.pipeline_mode<synchronous>, transform_indices = @transform_2, window_bounds = array<i64: 8, 8, 16>}, {pipeline_mode = #tpu.pipeline_mode<synchronous>, transform_indices = @transform_3, window_bounds = array<i64: 4, 16, 512>}, {pipeline_mode = #tpu.pipeline_mode<synchronous>, transform_indices = @transform_4, window_bounds = array<i64: 128, 512>}, {pipeline_mode = #tpu.pipeline_mode<synchronous>, transform_indices = @transform_5, window_bounds = array<i64: 128, 32>}, {pipeline_mode = #tpu.pipeline_mode<synchronous>, transform_indices = @transform_6, window_bounds = array<i64: 32, 128>}, {pipeline_mode = #tpu.pipeline_mode<synchronous>, transform_indices = @transform_7, window_bounds = array<i64: 16, 512>}, {transform_indices = @transform_8, window_bounds = array<i64: 1, 8, 128>}]} {
    %c0 = arith.constant 0 : index
    %c0_0 = arith.constant 0 : index
    %0 = vector.load %arg8[%c0, %c0_0] : memref<16x512xf32, #tpu.memory_space<vmem>>, vector<16x512xf32>
    %1 = vector.extract_strided_slice %0 {offsets = [0, 0], sizes = [1, 8], strides = [1, 1]} : vector<16x512xf32> to vector<1x8xf32>
    %2 = vector.extract_strided_slice %0 {offsets = [1, 0], sizes = [1, 8], strides = [1, 1]} : vector<16x512xf32> to vector<1x8xf32>
    %3 = vector.extract_strided_slice %0 {offsets = [2, 0], sizes = [1, 8], strides = [1, 1]} : vector<16x512xf32> to vector<1x8xf32>
    %4 = vector.extract_strided_slice %0 {offsets = [3, 0], sizes = [1, 16], strides = [1, 1]} : vector<16x512xf32> to vector<1x16xf32>
    %5 = vector.extract_strided_slice %0 {offsets = [4, 0], sizes = [1, 16], strides = [1, 1]} : vector<16x512xf32> to vector<1x16xf32>
    %6 = vector.extract_strided_slice %0 {offsets = [5, 0], sizes = [1, 16], strides = [1, 1]} : vector<16x512xf32> to vector<1x16xf32>
    %7 = vector.extract_strided_slice %0 {offsets = [6, 0], sizes = [1, 512], strides = [1, 1]} : vector<16x512xf32> to vector<1x512xf32>
    %8 = vector.extract_strided_slice %0 {offsets = [7, 0], sizes = [1, 32], strides = [1, 1]} : vector<16x512xf32> to vector<1x32xf32>
    %9 = vector.extract_strided_slice %0 {offsets = [8, 0], sizes = [1, 128], strides = [1, 1]} : vector<16x512xf32> to vector<1x128xf32>
    %c0_1 = arith.constant 0 : index
    %c0_2 = arith.constant 0 : index
    %c0_3 = arith.constant 0 : index
    %10 = vector.load %arg1[%c0_1, %c0_2, %c0_3] : memref<1x280x8xbf16, #tpu.memory_space<vmem>>, vector<1x280x8xbf16>
    %11 = vector.shape_cast %10 : vector<1x280x8xbf16> to vector<280x8xbf16>
    %c0_4 = arith.constant 0 : index
    %c0_5 = arith.constant 0 : index
    %12 = vector.load %arg2[%c0_4, %c0_5] : memref<8x8xbf16, #tpu.memory_space<vmem>>, vector<8x8xbf16>
    %cst = arith.constant dense<0.000000e+00> : vector<280x8xf32>
    %13 = tpu.matmul %11, %12, %cst {dimension_numbers = #tpu.dot_dimension_numbers<[1], [0], [0], [1], [0, 0, 1, 1], [], []>} : vector<280x8xbf16>, vector<8x8xbf16>, vector<280x8xf32> -> vector<280x8xf32>
    %14 = vector.broadcast %1 : vector<1x8xf32> to vector<280x8xf32>
    %15 = arith.addf %13, %14 : vector<280x8xf32>
    %cst_6 = arith.constant 0.000000e+00 : f32
    %16 = vector.broadcast %cst_6 : f32 to vector<280x8xf32>
    %17 = arith.maximumf %15, %16 : vector<280x8xf32>
    %18 = vector.broadcast %2 : vector<1x8xf32> to vector<280x8xf32>
    %19 = arith.mulf %17, %18 : vector<280x8xf32>
    %20 = vector.broadcast %3 : vector<1x8xf32> to vector<280x8xf32>
    %21 = arith.addf %19, %20 : vector<280x8xf32>
    %22 = vector.shape_cast %21 : vector<280x8xf32> to vector<5x56x8xf32>
    %c0_7 = arith.constant 0 : index
    %c0_8 = arith.constant 0 : index
    %c0_9 = arith.constant 0 : index
    %23 = vector.load %arg3[%c0_7, %c0_8, %c0_9] : memref<8x8x16xf32, #tpu.memory_space<vmem>>, vector<8x8x16xf32>
    %cst_10 = arith.constant 0.000000e+00 : f32
    %24 = vector.broadcast %cst_10 : f32 to vector<128x16xf32>
    %25 = vector.extract_strided_slice %22 {offsets = [0, 0, 0], sizes = [4, 32, 8], strides = [1, 1, 1]} : vector<5x56x8xf32> to vector<4x32x8xf32>
    %26 = vector.shape_cast %25 : vector<4x32x8xf32> to vector<128x8xf32>
    %27 = vector.extract_strided_slice %23 {offsets = [0, 0, 0], sizes = [1, 8, 16], strides = [1, 1, 1]} : vector<8x8x16xf32> to vector<1x8x16xf32>
    %28 = vector.shape_cast %27 : vector<1x8x16xf32> to vector<8x16xf32>
    %cst_11 = arith.constant dense<0.000000e+00> : vector<128x16xf32>
    %29 = tpu.matmul %26, %28, %cst_11 {dimension_numbers = #tpu.dot_dimension_numbers<[1], [0], [0], [1], [0, 0, 1, 1], [], []>} : vector<128x8xf32>, vector<8x16xf32>, vector<128x16xf32> -> vector<128x16xf32>
    %30 = arith.addf %24, %29 : vector<128x16xf32>
    %31 = vector.extract_strided_slice %22 {offsets = [1, 0, 0], sizes = [4, 32, 8], strides = [1, 1, 1]} : vector<5x56x8xf32> to vector<4x32x8xf32>
    %32 = vector.shape_cast %31 : vector<4x32x8xf32> to vector<128x8xf32>
    %33 = vector.extract_strided_slice %23 {offsets = [1, 0, 0], sizes = [1, 8, 16], strides = [1, 1, 1]} : vector<8x8x16xf32> to vector<1x8x16xf32>
    %34 = vector.shape_cast %33 : vector<1x8x16xf32> to vector<8x16xf32>
    %cst_12 = arith.constant dense<0.000000e+00> : vector<128x16xf32>
    %35 = tpu.matmul %32, %34, %cst_12 {dimension_numbers = #tpu.dot_dimension_numbers<[1], [0], [0], [1], [0, 0, 1, 1], [], []>} : vector<128x8xf32>, vector<8x16xf32>, vector<128x16xf32> -> vector<128x16xf32>
    %36 = arith.addf %30, %35 : vector<128x16xf32>
    %37 = vector.extract_strided_slice %22 {offsets = [0, 8, 0], sizes = [4, 32, 8], strides = [1, 1, 1]} : vector<5x56x8xf32> to vector<4x32x8xf32>
    %38 = vector.shape_cast %37 : vector<4x32x8xf32> to vector<128x8xf32>
    %39 = vector.extract_strided_slice %23 {offsets = [2, 0, 0], sizes = [1, 8, 16], strides = [1, 1, 1]} : vector<8x8x16xf32> to vector<1x8x16xf32>
    %40 = vector.shape_cast %39 : vector<1x8x16xf32> to vector<8x16xf32>
    %cst_13 = arith.constant dense<0.000000e+00> : vector<128x16xf32>
    %41 = tpu.matmul %38, %40, %cst_13 {dimension_numbers = #tpu.dot_dimension_numbers<[1], [0], [0], [1], [0, 0, 1, 1], [], []>} : vector<128x8xf32>, vector<8x16xf32>, vector<128x16xf32> -> vector<128x16xf32>
    %42 = arith.addf %36, %41 : vector<128x16xf32>
    %43 = vector.extract_strided_slice %22 {offsets = [1, 8, 0], sizes = [4, 32, 8], strides = [1, 1, 1]} : vector<5x56x8xf32> to vector<4x32x8xf32>
    %44 = vector.shape_cast %43 : vector<4x32x8xf32> to vector<128x8xf32>
    %45 = vector.extract_strided_slice %23 {offsets = [3, 0, 0], sizes = [1, 8, 16], strides = [1, 1, 1]} : vector<8x8x16xf32> to vector<1x8x16xf32>
    %46 = vector.shape_cast %45 : vector<1x8x16xf32> to vector<8x16xf32>
    %cst_14 = arith.constant dense<0.000000e+00> : vector<128x16xf32>
    %47 = tpu.matmul %44, %46, %cst_14 {dimension_numbers = #tpu.dot_dimension_numbers<[1], [0], [0], [1], [0, 0, 1, 1], [], []>} : vector<128x8xf32>, vector<8x16xf32>, vector<128x16xf32> -> vector<128x16xf32>
    %48 = arith.addf %42, %47 : vector<128x16xf32>
    %49 = vector.extract_strided_slice %22 {offsets = [0, 16, 0], sizes = [4, 32, 8], strides = [1, 1, 1]} : vector<5x56x8xf32> to vector<4x32x8xf32>
    %50 = vector.shape_cast %49 : vector<4x32x8xf32> to vector<128x8xf32>
    %51 = vector.extract_strided_slice %23 {offsets = [4, 0, 0], sizes = [1, 8, 16], strides = [1, 1, 1]} : vector<8x8x16xf32> to vector<1x8x16xf32>
    %52 = vector.shape_cast %51 : vector<1x8x16xf32> to vector<8x16xf32>
    %cst_15 = arith.constant dense<0.000000e+00> : vector<128x16xf32>
    %53 = tpu.matmul %50, %52, %cst_15 {dimension_numbers = #tpu.dot_dimension_numbers<[1], [0], [0], [1], [0, 0, 1, 1], [], []>} : vector<128x8xf32>, vector<8x16xf32>, vector<128x16xf32> -> vector<128x16xf32>
    %54 = arith.addf %48, %53 : vector<128x16xf32>
    %55 = vector.extract_strided_slice %22 {offsets = [1, 16, 0], sizes = [4, 32, 8], strides = [1, 1, 1]} : vector<5x56x8xf32> to vector<4x32x8xf32>
    %56 = vector.shape_cast %55 : vector<4x32x8xf32> to vector<128x8xf32>
    %57 = vector.extract_strided_slice %23 {offsets = [5, 0, 0], sizes = [1, 8, 16], strides = [1, 1, 1]} : vector<8x8x16xf32> to vector<1x8x16xf32>
    %58 = vector.shape_cast %57 : vector<1x8x16xf32> to vector<8x16xf32>
    %cst_16 = arith.constant dense<0.000000e+00> : vector<128x16xf32>
    %59 = tpu.matmul %56, %58, %cst_16 {dimension_numbers = #tpu.dot_dimension_numbers<[1], [0], [0], [1], [0, 0, 1, 1], [], []>} : vector<128x8xf32>, vector<8x16xf32>, vector<128x16xf32> -> vector<128x16xf32>
    %60 = arith.addf %54, %59 : vector<128x16xf32>
    %61 = vector.extract_strided_slice %22 {offsets = [0, 24, 0], sizes = [4, 32, 8], strides = [1, 1, 1]} : vector<5x56x8xf32> to vector<4x32x8xf32>
    %62 = vector.shape_cast %61 : vector<4x32x8xf32> to vector<128x8xf32>
    %63 = vector.extract_strided_slice %23 {offsets = [6, 0, 0], sizes = [1, 8, 16], strides = [1, 1, 1]} : vector<8x8x16xf32> to vector<1x8x16xf32>
    %64 = vector.shape_cast %63 : vector<1x8x16xf32> to vector<8x16xf32>
    %cst_17 = arith.constant dense<0.000000e+00> : vector<128x16xf32>
    %65 = tpu.matmul %62, %64, %cst_17 {dimension_numbers = #tpu.dot_dimension_numbers<[1], [0], [0], [1], [0, 0, 1, 1], [], []>} : vector<128x8xf32>, vector<8x16xf32>, vector<128x16xf32> -> vector<128x16xf32>
    %66 = arith.addf %60, %65 : vector<128x16xf32>
    %67 = vector.extract_strided_slice %22 {offsets = [1, 24, 0], sizes = [4, 32, 8], strides = [1, 1, 1]} : vector<5x56x8xf32> to vector<4x32x8xf32>
    %68 = vector.shape_cast %67 : vector<4x32x8xf32> to vector<128x8xf32>
    %69 = vector.extract_strided_slice %23 {offsets = [7, 0, 0], sizes = [1, 8, 16], strides = [1, 1, 1]} : vector<8x8x16xf32> to vector<1x8x16xf32>
    %70 = vector.shape_cast %69 : vector<1x8x16xf32> to vector<8x16xf32>
    %cst_18 = arith.constant dense<0.000000e+00> : vector<128x16xf32>
    %71 = tpu.matmul %68, %70, %cst_18 {dimension_numbers = #tpu.dot_dimension_numbers<[1], [0], [0], [1], [0, 0, 1, 1], [], []>} : vector<128x8xf32>, vector<8x16xf32>, vector<128x16xf32> -> vector<128x16xf32>
    %72 = arith.addf %66, %71 : vector<128x16xf32>
    %73 = vector.broadcast %4 : vector<1x16xf32> to vector<128x16xf32>
    %74 = arith.addf %72, %73 : vector<128x16xf32>
    %cst_19 = arith.constant 0.000000e+00 : f32
    %75 = vector.broadcast %cst_19 : f32 to vector<128x16xf32>
    %76 = arith.maximumf %74, %75 : vector<128x16xf32>
    %77 = vector.broadcast %5 : vector<1x16xf32> to vector<128x16xf32>
    %78 = arith.mulf %76, %77 : vector<128x16xf32>
    %79 = vector.broadcast %6 : vector<1x16xf32> to vector<128x16xf32>
    %80 = arith.addf %78, %79 : vector<128x16xf32>
    %81 = arith.truncf %80 : vector<128x16xf32> to vector<128x16xbf16>
    %82 = vector.shape_cast %81 : vector<128x16xbf16> to vector<4x32x16xbf16>
    %c0_20 = arith.constant 0 : index
    %c0_21 = arith.constant 0 : index
    %c0_22 = arith.constant 0 : index
    %83 = vector.load %arg4[%c0_20, %c0_21, %c0_22] : memref<4x16x512xbf16, #tpu.memory_space<vmem>>, vector<4x16x512xbf16>
    %cst_23 = arith.constant 0.000000e+00 : f32
    %84 = vector.broadcast %cst_23 : f32 to vector<32x512xf32>
    %85 = vector.extract_strided_slice %82 {offsets = [0, 0, 0], sizes = [1, 32, 16], strides = [1, 1, 1]} : vector<4x32x16xbf16> to vector<1x32x16xbf16>
    %86 = vector.shape_cast %85 : vector<1x32x16xbf16> to vector<32x16xbf16>
    %87 = vector.extract_strided_slice %83 {offsets = [0, 0, 0], sizes = [1, 16, 512], strides = [1, 1, 1]} : vector<4x16x512xbf16> to vector<1x16x512xbf16>
    %88 = vector.shape_cast %87 : vector<1x16x512xbf16> to vector<16x512xbf16>
    %cst_24 = arith.constant dense<0.000000e+00> : vector<32x512xf32>
    %89 = tpu.matmul %86, %88, %cst_24 {dimension_numbers = #tpu.dot_dimension_numbers<[1], [0], [0], [1], [0, 0, 1, 1], [], []>} : vector<32x16xbf16>, vector<16x512xbf16>, vector<32x512xf32> -> vector<32x512xf32>
    %90 = arith.addf %84, %89 : vector<32x512xf32>
    %91 = vector.extract_strided_slice %82 {offsets = [1, 0, 0], sizes = [1, 32, 16], strides = [1, 1, 1]} : vector<4x32x16xbf16> to vector<1x32x16xbf16>
    %92 = vector.shape_cast %91 : vector<1x32x16xbf16> to vector<32x16xbf16>
    %93 = vector.extract_strided_slice %83 {offsets = [1, 0, 0], sizes = [1, 16, 512], strides = [1, 1, 1]} : vector<4x16x512xbf16> to vector<1x16x512xbf16>
    %94 = vector.shape_cast %93 : vector<1x16x512xbf16> to vector<16x512xbf16>
    %cst_25 = arith.constant dense<0.000000e+00> : vector<32x512xf32>
    %95 = tpu.matmul %92, %94, %cst_25 {dimension_numbers = #tpu.dot_dimension_numbers<[1], [0], [0], [1], [0, 0, 1, 1], [], []>} : vector<32x16xbf16>, vector<16x512xbf16>, vector<32x512xf32> -> vector<32x512xf32>
    %96 = arith.addf %90, %95 : vector<32x512xf32>
    %97 = vector.extract_strided_slice %82 {offsets = [2, 0, 0], sizes = [1, 32, 16], strides = [1, 1, 1]} : vector<4x32x16xbf16> to vector<1x32x16xbf16>
    %98 = vector.shape_cast %97 : vector<1x32x16xbf16> to vector<32x16xbf16>
    %99 = vector.extract_strided_slice %83 {offsets = [2, 0, 0], sizes = [1, 16, 512], strides = [1, 1, 1]} : vector<4x16x512xbf16> to vector<1x16x512xbf16>
    %100 = vector.shape_cast %99 : vector<1x16x512xbf16> to vector<16x512xbf16>
    %cst_26 = arith.constant dense<0.000000e+00> : vector<32x512xf32>
    %101 = tpu.matmul %98, %100, %cst_26 {dimension_numbers = #tpu.dot_dimension_numbers<[1], [0], [0], [1], [0, 0, 1, 1], [], []>} : vector<32x16xbf16>, vector<16x512xbf16>, vector<32x512xf32> -> vector<32x512xf32>
    %102 = arith.addf %96, %101 : vector<32x512xf32>
    %103 = vector.extract_strided_slice %82 {offsets = [3, 0, 0], sizes = [1, 32, 16], strides = [1, 1, 1]} : vector<4x32x16xbf16> to vector<1x32x16xbf16>
    %104 = vector.shape_cast %103 : vector<1x32x16xbf16> to vector<32x16xbf16>
    %105 = vector.extract_strided_slice %83 {offsets = [3, 0, 0], sizes = [1, 16, 512], strides = [1, 1, 1]} : vector<4x16x512xbf16> to vector<1x16x512xbf16>
    %106 = vector.shape_cast %105 : vector<1x16x512xbf16> to vector<16x512xbf16>
    %cst_27 = arith.constant dense<0.000000e+00> : vector<32x512xf32>
    %107 = tpu.matmul %104, %106, %cst_27 {dimension_numbers = #tpu.dot_dimension_numbers<[1], [0], [0], [1], [0, 0, 1, 1], [], []>} : vector<32x16xbf16>, vector<16x512xbf16>, vector<32x512xf32> -> vector<32x512xf32>
    %108 = arith.addf %102, %107 : vector<32x512xf32>
    %109 = vector.broadcast %7 : vector<1x512xf32> to vector<32x512xf32>
    %110 = arith.addf %108, %109 : vector<32x512xf32>
    %c0_28 = arith.constant 0 : index
    %c0_29 = arith.constant 0 : index
    %111 = vector.load %arg5[%c0_28, %c0_29] : memref<128x512xbf16, #tpu.memory_space<vmem>>, vector<128x512xbf16>
    %cst_30 = arith.constant 0.000000e+00 : f32
    %112 = vector.broadcast %cst_30 : f32 to vector<8x128xf32>
    %cst_31 = arith.constant 0.000000e+00 : f32
    %113 = vector.broadcast %cst_31 : f32 to vector<8x128xf32>
    %114 = vector.extract_strided_slice %110 {offsets = [0, 0], sizes = [8, 512], strides = [1, 1]} : vector<32x512xf32> to vector<8x512xf32>
    %115 = arith.truncf %112 : vector<8x128xf32> to vector<8x128xbf16>
    %cst_32 = arith.constant dense<0.000000e+00> : vector<8x512xf32>
    %116 = tpu.matmul %115, %111, %cst_32 {dimension_numbers = #tpu.dot_dimension_numbers<[1], [0], [0], [1], [0, 0, 1, 1], [], []>} : vector<8x128xbf16>, vector<128x512xbf16>, vector<8x512xf32> -> vector<8x512xf32>
    %117 = arith.addf %114, %116 : vector<8x512xf32>
    %118 = vector.extract_strided_slice %117 {offsets = [0, 0], sizes = [8, 128], strides = [1, 1]} : vector<8x512xf32> to vector<8x128xf32>
    %119 = arith.negf %118 : vector<8x128xf32>
    %120 = math.exp %119 : vector<8x128xf32>
    %cst_33 = arith.constant 1.000000e+00 : f32
    %121 = vector.broadcast %cst_33 : f32 to vector<8x128xf32>
    %122 = arith.addf %121, %120 : vector<8x128xf32>
    %123 = arith.divf %121, %122 : vector<8x128xf32>
    %124 = vector.extract_strided_slice %117 {offsets = [0, 128], sizes = [8, 128], strides = [1, 1]} : vector<8x512xf32> to vector<8x128xf32>
    %125 = arith.negf %124 : vector<8x128xf32>
    %126 = math.exp %125 : vector<8x128xf32>
    %cst_34 = arith.constant 1.000000e+00 : f32
    %127 = vector.broadcast %cst_34 : f32 to vector<8x128xf32>
    %128 = arith.addf %127, %126 : vector<8x128xf32>
    %129 = arith.divf %127, %128 : vector<8x128xf32>
    %130 = vector.extract_strided_slice %117 {offsets = [0, 256], sizes = [8, 128], strides = [1, 1]} : vector<8x512xf32> to vector<8x128xf32>
    %131 = math.tanh %130 : vector<8x128xf32>
    %132 = vector.extract_strided_slice %117 {offsets = [0, 384], sizes = [8, 128], strides = [1, 1]} : vector<8x512xf32> to vector<8x128xf32>
    %133 = arith.negf %132 : vector<8x128xf32>
    %134 = math.exp %133 : vector<8x128xf32>
    %cst_35 = arith.constant 1.000000e+00 : f32
    %135 = vector.broadcast %cst_35 : f32 to vector<8x128xf32>
    %136 = arith.addf %135, %134 : vector<8x128xf32>
    %137 = arith.divf %135, %136 : vector<8x128xf32>
    %138 = arith.mulf %129, %113 : vector<8x128xf32>
    %139 = arith.mulf %123, %131 : vector<8x128xf32>
    %140 = arith.addf %138, %139 : vector<8x128xf32>
    %141 = math.tanh %140 : vector<8x128xf32>
    %142 = arith.mulf %137, %141 : vector<8x128xf32>
    %143 = vector.extract_strided_slice %110 {offsets = [8, 0], sizes = [8, 512], strides = [1, 1]} : vector<32x512xf32> to vector<8x512xf32>
    %144 = arith.truncf %142 : vector<8x128xf32> to vector<8x128xbf16>
    %cst_36 = arith.constant dense<0.000000e+00> : vector<8x512xf32>
    %145 = tpu.matmul %144, %111, %cst_36 {dimension_numbers = #tpu.dot_dimension_numbers<[1], [0], [0], [1], [0, 0, 1, 1], [], []>} : vector<8x128xbf16>, vector<128x512xbf16>, vector<8x512xf32> -> vector<8x512xf32>
    %146 = arith.addf %143, %145 : vector<8x512xf32>
    %147 = vector.extract_strided_slice %146 {offsets = [0, 0], sizes = [8, 128], strides = [1, 1]} : vector<8x512xf32> to vector<8x128xf32>
    %148 = arith.negf %147 : vector<8x128xf32>
    %149 = math.exp %148 : vector<8x128xf32>
    %cst_37 = arith.constant 1.000000e+00 : f32
    %150 = vector.broadcast %cst_37 : f32 to vector<8x128xf32>
    %151 = arith.addf %150, %149 : vector<8x128xf32>
    %152 = arith.divf %150, %151 : vector<8x128xf32>
    %153 = vector.extract_strided_slice %146 {offsets = [0, 128], sizes = [8, 128], strides = [1, 1]} : vector<8x512xf32> to vector<8x128xf32>
    %154 = arith.negf %153 : vector<8x128xf32>
    %155 = math.exp %154 : vector<8x128xf32>
    %cst_38 = arith.constant 1.000000e+00 : f32
    %156 = vector.broadcast %cst_38 : f32 to vector<8x128xf32>
    %157 = arith.addf %156, %155 : vector<8x128xf32>
    %158 = arith.divf %156, %157 : vector<8x128xf32>
    %159 = vector.extract_strided_slice %146 {offsets = [0, 256], sizes = [8, 128], strides = [1, 1]} : vector<8x512xf32> to vector<8x128xf32>
    %160 = math.tanh %159 : vector<8x128xf32>
    %161 = vector.extract_strided_slice %146 {offsets = [0, 384], sizes = [8, 128], strides = [1, 1]} : vector<8x512xf32> to vector<8x128xf32>
    %162 = arith.negf %161 : vector<8x128xf32>
    %163 = math.exp %162 : vector<8x128xf32>
    %cst_39 = arith.constant 1.000000e+00 : f32
    %164 = vector.broadcast %cst_39 : f32 to vector<8x128xf32>
    %165 = arith.addf %164, %163 : vector<8x128xf32>
    %166 = arith.divf %164, %165 : vector<8x128xf32>
    %167 = arith.mulf %158, %140 : vector<8x128xf32>
    %168 = arith.mulf %152, %160 : vector<8x128xf32>
    %169 = arith.addf %167, %168 : vector<8x128xf32>
    %170 = math.tanh %169 : vector<8x128xf32>
    %171 = arith.mulf %166, %170 : vector<8x128xf32>
    %172 = vector.extract_strided_slice %110 {offsets = [16, 0], sizes = [8, 512], strides = [1, 1]} : vector<32x512xf32> to vector<8x512xf32>
    %173 = arith.truncf %171 : vector<8x128xf32> to vector<8x128xbf16>
    %cst_40 = arith.constant dense<0.000000e+00> : vector<8x512xf32>
    %174 = tpu.matmul %173, %111, %cst_40 {dimension_numbers = #tpu.dot_dimension_numbers<[1], [0], [0], [1], [0, 0, 1, 1], [], []>} : vector<8x128xbf16>, vector<128x512xbf16>, vector<8x512xf32> -> vector<8x512xf32>
    %175 = arith.addf %172, %174 : vector<8x512xf32>
    %176 = vector.extract_strided_slice %175 {offsets = [0, 0], sizes = [8, 128], strides = [1, 1]} : vector<8x512xf32> to vector<8x128xf32>
    %177 = arith.negf %176 : vector<8x128xf32>
    %178 = math.exp %177 : vector<8x128xf32>
    %cst_41 = arith.constant 1.000000e+00 : f32
    %179 = vector.broadcast %cst_41 : f32 to vector<8x128xf32>
    %180 = arith.addf %179, %178 : vector<8x128xf32>
    %181 = arith.divf %179, %180 : vector<8x128xf32>
    %182 = vector.extract_strided_slice %175 {offsets = [0, 128], sizes = [8, 128], strides = [1, 1]} : vector<8x512xf32> to vector<8x128xf32>
    %183 = arith.negf %182 : vector<8x128xf32>
    %184 = math.exp %183 : vector<8x128xf32>
    %cst_42 = arith.constant 1.000000e+00 : f32
    %185 = vector.broadcast %cst_42 : f32 to vector<8x128xf32>
    %186 = arith.addf %185, %184 : vector<8x128xf32>
    %187 = arith.divf %185, %186 : vector<8x128xf32>
    %188 = vector.extract_strided_slice %175 {offsets = [0, 256], sizes = [8, 128], strides = [1, 1]} : vector<8x512xf32> to vector<8x128xf32>
    %189 = math.tanh %188 : vector<8x128xf32>
    %190 = vector.extract_strided_slice %175 {offsets = [0, 384], sizes = [8, 128], strides = [1, 1]} : vector<8x512xf32> to vector<8x128xf32>
    %191 = arith.negf %190 : vector<8x128xf32>
    %192 = math.exp %191 : vector<8x128xf32>
    %cst_43 = arith.constant 1.000000e+00 : f32
    %193 = vector.broadcast %cst_43 : f32 to vector<8x128xf32>
    %194 = arith.addf %193, %192 : vector<8x128xf32>
    %195 = arith.divf %193, %194 : vector<8x128xf32>
    %196 = arith.mulf %187, %169 : vector<8x128xf32>
    %197 = arith.mulf %181, %189 : vector<8x128xf32>
    %198 = arith.addf %196, %197 : vector<8x128xf32>
    %199 = math.tanh %198 : vector<8x128xf32>
    %200 = arith.mulf %195, %199 : vector<8x128xf32>
    %201 = vector.extract_strided_slice %110 {offsets = [24, 0], sizes = [8, 512], strides = [1, 1]} : vector<32x512xf32> to vector<8x512xf32>
    %202 = arith.truncf %200 : vector<8x128xf32> to vector<8x128xbf16>
    %cst_44 = arith.constant dense<0.000000e+00> : vector<8x512xf32>
    %203 = tpu.matmul %202, %111, %cst_44 {dimension_numbers = #tpu.dot_dimension_numbers<[1], [0], [0], [1], [0, 0, 1, 1], [], []>} : vector<8x128xbf16>, vector<128x512xbf16>, vector<8x512xf32> -> vector<8x512xf32>
    %204 = arith.addf %201, %203 : vector<8x512xf32>
    %205 = vector.extract_strided_slice %204 {offsets = [0, 0], sizes = [8, 128], strides = [1, 1]} : vector<8x512xf32> to vector<8x128xf32>
    %206 = arith.negf %205 : vector<8x128xf32>
    %207 = math.exp %206 : vector<8x128xf32>
    %cst_45 = arith.constant 1.000000e+00 : f32
    %208 = vector.broadcast %cst_45 : f32 to vector<8x128xf32>
    %209 = arith.addf %208, %207 : vector<8x128xf32>
    %210 = arith.divf %208, %209 : vector<8x128xf32>
    %211 = vector.extract_strided_slice %204 {offsets = [0, 128], sizes = [8, 128], strides = [1, 1]} : vector<8x512xf32> to vector<8x128xf32>
    %212 = arith.negf %211 : vector<8x128xf32>
    %213 = math.exp %212 : vector<8x128xf32>
    %cst_46 = arith.constant 1.000000e+00 : f32
    %214 = vector.broadcast %cst_46 : f32 to vector<8x128xf32>
    %215 = arith.addf %214, %213 : vector<8x128xf32>
    %216 = arith.divf %214, %215 : vector<8x128xf32>
    %217 = vector.extract_strided_slice %204 {offsets = [0, 256], sizes = [8, 128], strides = [1, 1]} : vector<8x512xf32> to vector<8x128xf32>
    %218 = math.tanh %217 : vector<8x128xf32>
    %219 = vector.extract_strided_slice %204 {offsets = [0, 384], sizes = [8, 128], strides = [1, 1]} : vector<8x512xf32> to vector<8x128xf32>
    %220 = arith.negf %219 : vector<8x128xf32>
    %221 = math.exp %220 : vector<8x128xf32>
    %cst_47 = arith.constant 1.000000e+00 : f32
    %222 = vector.broadcast %cst_47 : f32 to vector<8x128xf32>
    %223 = arith.addf %222, %221 : vector<8x128xf32>
    %224 = arith.divf %222, %223 : vector<8x128xf32>
    %225 = arith.mulf %216, %198 : vector<8x128xf32>
    %226 = arith.mulf %210, %218 : vector<8x128xf32>
    %227 = arith.addf %225, %226 : vector<8x128xf32>
    %228 = math.tanh %227 : vector<8x128xf32>
    %229 = arith.mulf %224, %228 : vector<8x128xf32>
    %230 = math.tanh %229 : vector<8x128xf32>
    %231 = arith.truncf %230 : vector<8x128xf32> to vector<8x128xbf16>
    %c0_48 = arith.constant 0 : index
    %c0_49 = arith.constant 0 : index
    %232 = vector.load %arg6[%c0_48, %c0_49] : memref<128x32xbf16, #tpu.memory_space<vmem>>, vector<128x32xbf16>
    %cst_50 = arith.constant dense<0.000000e+00> : vector<8x32xf32>
    %233 = tpu.matmul %231, %232, %cst_50 {dimension_numbers = #tpu.dot_dimension_numbers<[1], [0], [0], [1], [0, 0, 1, 1], [], []>} : vector<8x128xbf16>, vector<128x32xbf16>, vector<8x32xf32> -> vector<8x32xf32>
    %234 = vector.broadcast %8 : vector<1x32xf32> to vector<8x32xf32>
    %235 = arith.addf %233, %234 : vector<8x32xf32>
    %cst_51 = arith.constant 0.000000e+00 : f32
    %236 = vector.broadcast %cst_51 : f32 to vector<8x32xf32>
    %237 = arith.maximumf %235, %236 : vector<8x32xf32>
    %238 = arith.truncf %237 : vector<8x32xf32> to vector<8x32xbf16>
    %c0_52 = arith.constant 0 : index
    %c0_53 = arith.constant 0 : index
    %239 = vector.load %arg7[%c0_52, %c0_53] : memref<32x128xbf16, #tpu.memory_space<vmem>>, vector<32x128xbf16>
    %cst_54 = arith.constant dense<0.000000e+00> : vector<8x128xf32>
    %240 = tpu.matmul %238, %239, %cst_54 {dimension_numbers = #tpu.dot_dimension_numbers<[1], [0], [0], [1], [0, 0, 1, 1], [], []>} : vector<8x32xbf16>, vector<32x128xbf16>, vector<8x128xf32> -> vector<8x128xf32>
    %241 = vector.broadcast %9 : vector<1x128xf32> to vector<8x128xf32>
    %242 = arith.addf %240, %241 : vector<8x128xf32>
    %c0_55 = arith.constant 0 : index
    %c0_56 = arith.constant 0 : index
    %c0_57 = arith.constant 0 : index
    %243 = vector.load %arg9[%c0_55, %c0_56, %c0_57] : memref<1x8x128xf32, #tpu.memory_space<vmem>>, vector<1x8x128xf32>
    %244 = vector.shape_cast %243 : vector<1x8x128xf32> to vector<8x128xf32>
    %245 = vector.shape_cast %242 : vector<8x128xf32> to vector<1x8x128xf32>
    tpu.vector_store %arg9[%c0_55, %c0_56, %c0_57], %245 {strides = array<i32>} : memref<1x8x128xf32, #tpu.memory_space<vmem>>, vector<1x8x128xf32>,
    return
  }
  func.func @transform_0(%arg0: i32) -> (i32, i32, i32) {
    %c0_i32 = arith.constant 0 : i32
    %c0_i32_0 = arith.constant 0 : i32
    %c0_i32_1 = arith.constant 0 : i32
    return %arg0, %c0_i32, %c0_i32_0 : i32, i32, i32
  }
  func.func @transform_1(%arg0: i32) -> (i32, i32) {
    %c0_i32 = arith.constant 0 : i32
    %c0_i32_0 = arith.constant 0 : i32
    %c0_i32_1 = arith.constant 0 : i32
    return %c0_i32, %c0_i32_0 : i32, i32
  }
  func.func @transform_2(%arg0: i32) -> (i32, i32, i32) {
    %c0_i32 = arith.constant 0 : i32
    %c0_i32_0 = arith.constant 0 : i32
    %c0_i32_1 = arith.constant 0 : i32
    %c0_i32_2 = arith.constant 0 : i32
    return %c0_i32, %c0_i32_0, %c0_i32_1 : i32, i32, i32
  }
  func.func @transform_3(%arg0: i32) -> (i32, i32, i32) {
    %c0_i32 = arith.constant 0 : i32
    %c0_i32_0 = arith.constant 0 : i32
    %c0_i32_1 = arith.constant 0 : i32
    %c0_i32_2 = arith.constant 0 : i32
    return %c0_i32, %c0_i32_0, %c0_i32_1 : i32, i32, i32
  }
  func.func @transform_4(%arg0: i32) -> (i32, i32) {
    %c0_i32 = arith.constant 0 : i32
    %c0_i32_0 = arith.constant 0 : i32
    %c0_i32_1 = arith.constant 0 : i32
    return %c0_i32, %c0_i32_0 : i32, i32
  }
  func.func @transform_5(%arg0: i32) -> (i32, i32) {
    %c0_i32 = arith.constant 0 : i32
    %c0_i32_0 = arith.constant 0 : i32
    %c0_i32_1 = arith.constant 0 : i32
    return %c0_i32, %c0_i32_0 : i32, i32
  }
  func.func @transform_6(%arg0: i32) -> (i32, i32) {
    %c0_i32 = arith.constant 0 : i32
    %c0_i32_0 = arith.constant 0 : i32
    %c0_i32_1 = arith.constant 0 : i32
    return %c0_i32, %c0_i32_0 : i32, i32
  }
  func.func @transform_7(%arg0: i32) -> (i32, i32) {
    %c0_i32 = arith.constant 0 : i32
    %c0_i32_0 = arith.constant 0 : i32
    %c0_i32_1 = arith.constant 0 : i32
    return %c0_i32, %c0_i32_0 : i32, i32
  }
  func.func @transform_8(%arg0: i32) -> (i32, i32, i32) {
    %c0_i32 = arith.constant 0 : i32
    %c0_i32_0 = arith.constant 0 : i32
    %c0_i32_1 = arith.constant 0 : i32
    return %arg0, %c0_i32, %c0_i32_0 : i32, i32, i32
  }
}

</mosaic_0001>

<llo_original>
// kernel: lopez17_forward.1
$region0: #{lopez17_forward.1}
  #allocation0 [shape = 'u32[]', space=smem, size = 0x4, offset = 0x4, fixed_abs, tag = 'smem constant byte address 0x4 - core index']
  #allocation1 [shape = 'u32[72,128]{1,0:T(1,128)}', space=vmem, size = 0x9000, scoped, tag = 'internal scratch']
  %s0 = inlined_call_operand.vmem [shape: bf16[1,280,8], index: 0, kind: input, shape index: {}]
  %s1 = inlined_call_operand.vmem [shape: bf16[8,8], index: 1, kind: input, shape index: {}]
  %s2 = inlined_call_operand.vmem [shape: f32[8,8,16], index: 2, kind: input, shape index: {}]
  %s3 = inlined_call_operand.vmem [shape: bf16[4,16,512], index: 3, kind: input, shape index: {}]
  %s4 = inlined_call_operand.vmem [shape: bf16[128,512], index: 4, kind: input, shape index: {}]
  %s5 = inlined_call_operand.vmem [shape: bf16[128,32], index: 5, kind: input, shape index: {}]
  %s6 = inlined_call_operand.vmem [shape: bf16[32,128], index: 6, kind: input, shape index: {}]
  %s7 = inlined_call_operand.vmem [shape: f32[16,512], index: 7, kind: input, shape index: {}]
  %s8 = inlined_call_operand.vmem [shape: f32[1,8,128], index: 8, kind: output, shape index: {}]
  %s9 = sld [smem:[#allocation0]]
  $region42: #{lopez17_forward.1} parent=0
    _
  %s11 = ssub.s32 1, %s9
  %s12 = scalar_select 0, %s11, %s9
  // Predicated region
  $region2: #{lopez17_forward.1} parent=0 // pred_check
    _
  $region3: #{lopez17_forward.1} parent=0 // pred_check_branch
    %14 = sbr.rel (0) target = $region5
  $region4: #{lopez17_forward.1} parent=0 // pred_region
    _
  $region5: #{lopez17_forward.1} parent=0 // pred_fallthru
    _
  // Predicated region
  $region6: #{lopez17_forward.1} parent=0 // pred_check
    _
  $region7: #{lopez17_forward.1} parent=0 // pred_check_branch
    %16 = sbr.rel (0) target = $region9
  $region8: #{lopez17_forward.1} parent=0 // pred_region
    _
  $region9: #{lopez17_forward.1} parent=0 // pred_fallthru
    _
  // Predicated region
  $region10: #{lopez17_forward.1} parent=0 // pred_check
    _
  $region11: #{lopez17_forward.1} parent=0 // pred_check_branch
    %18 = sbr.rel (0) target = $region13
  $region12: #{lopez17_forward.1} parent=0 // pred_region
    _
  $region13: #{lopez17_forward.1} parent=0 // pred_fallthru
    _
  // Predicated region
  $region14: #{lopez17_forward.1} parent=0 // pred_check
    _
  $region15: #{lopez17_forward.1} parent=0 // pred_check_branch
    %20 = sbr.rel (0) target = $region17
  $region16: #{lopez17_forward.1} parent=0 // pred_region
    _
  $region17: #{lopez17_forward.1} parent=0 // pred_fallthru
    _
  // Predicated region
  $region18: #{lopez17_forward.1} parent=0 // pred_check
    _
  $region19: #{lopez17_forward.1} parent=0 // pred_check_branch
    %22 = sbr.rel (0) target = $region21
  $region20: #{lopez17_forward.1} parent=0 // pred_region
    _
  $region21: #{lopez17_forward.1} parent=0 // pred_fallthru
    _
  // Predicated region
  $region22: #{lopez17_forward.1} parent=0 // pred_check
    _
  $region23: #{lopez17_forward.1} parent=0 // pred_check_branch
    %24 = sbr.rel (0) target = $region25
  $region24: #{lopez17_forward.1} parent=0 // pred_region
    _
  $region25: #{lopez17_forward.1} parent=0 // pred_fallthru
    _
  // Predicated region
  $region26: #{lopez17_forward.1} parent=0 // pred_check
    _
  $region27: #{lopez17_forward.1} parent=0 // pred_check_branch
    %26 = sbr.rel (0) target = $region29
  $region28: #{lopez17_forward.1} parent=0 // pred_region
    _
  $region29: #{lopez17_forward.1} parent=0 // pred_fallthru
    _
  // Predicated region
  $region30: #{lopez17_forward.1} parent=0 // pred_check
    _
  $region31: #{lopez17_forward.1} parent=0 // pred_check_branch
    %28 = sbr.rel (0) target = $region33
  $region32: #{lopez17_forward.1} parent=0 // pred_region
    _
  $region33: #{lopez17_forward.1} parent=0 // pred_fallthru
    _
  %v30 = vld [vmem:[%s7] sm:$0xff]
  %v31 = vld [vmem:[%s7 + $0x8] sm:$0xff]
  %v32 = vld [vmem:[%s7 + $0x10] sm:$0xff]
  %v33 = vld [vmem:[%s7 + $0x18] sm:$0xff]
  %v34 = vld [vmem:[%s7 + $0x20] sm:$0xff]
  %v35 = vld [vmem:[%s0] sm:$0xf]
  %v36 = vld [vmem:[%s0 + $0x4] sm:$0xf]
  %v37 = vld [vmem:[%s0 + $0x8] sm:$0xf]
  %v38 = vld [vmem:[%s0 + $0xc] sm:$0xf]
  %v39 = vld [vmem:[%s0 + $0x10] sm:$0xf]
  %v40 = vld [vmem:[%s0 + $0x14] sm:$0xf]
  %v41 = vld [vmem:[%s0 + $0x18] sm:$0xf]
  %v42 = vld [vmem:[%s0 + $0x1c] sm:$0xf]
  %v43 = vld [vmem:[%s0 + $0x20] sm:$0xf]
  %v44 = vld [vmem:[%s0 + $0x24] sm:$0xf]
  %v45 = vld [vmem:[%s0 + $0x28] sm:$0xf]
  %v46 = vld [vmem:[%s0 + $0x2c] sm:$0xf]
  %v47 = vld [vmem:[%s0 + $0x30] sm:$0xf]
  %v48 = vld [vmem:[%s0 + $0x34] sm:$0xf]
  %v49 = vld [vmem:[%s0 + $0x38] sm:$0xf]
  %v50 = vld [vmem:[%s0 + $0x3c] sm:$0xf]
  %v51 = vld [vmem:[%s0 + $0x40] sm:$0xf]
  %v52 = vld [vmem:[%s0 + $0x44] sm:$0xf]
  %v53 = vld [vmem:[%s0 + $0x48] sm:$0xf]
  %v54 = vld [vmem:[%s0 + $0x4c] sm:$0xf]
  %v55 = vld [vmem:[%s0 + $0x50] sm:$0xf]
  %v56 = vld [vmem:[%s0 + $0x54] sm:$0xf]
  %v57 = vld [vmem:[%s0 + $0x58] sm:$0xf]
  %v58 = vld [vmem:[%s0 + $0x5c] sm:$0xf]
  %v59 = vld [vmem:[%s0 + $0x60] sm:$0xf]
  %v60 = vld [vmem:[%s0 + $0x64] sm:$0xf]
  %v61 = vld [vmem:[%s0 + $0x68] sm:$0xf]
  %v62 = vld [vmem:[%s0 + $0x6c] sm:$0xf]
  %v63 = vld [vmem:[%s0 + $0x70] sm:$0xf]
  %v64 = vld [vmem:[%s0 + $0x74] sm:$0xf]
  %v65 = vld [vmem:[%s0 + $0x78] sm:$0xf]
  %v66 = vld [vmem:[%s0 + $0x7c] sm:$0xf]
  %v67 = vld [vmem:[%s0 + $0x80] sm:$0xf]
  %v68 = vld [vmem:[%s0 + $0x84] sm:$0xf]
  %v69 = vld [vmem:[%s0 + $0x88] sm:$0xf]
  %v70 = vld [vmem:[%s1] sm:$0xf]
  %v71 = vperm.slane %v30, 0
  %v107 = vunpack.c.l.b16 %v35
  %v108 = vunpack.c.l.b16 %v36
  %v109 = vunpack.c.l.b16 %v37
  %v110 = vunpack.c.l.b16 %v38
  %v111 = vunpack.c.l.b16 %v39
  %v112 = vunpack.c.l.b16 %v40
  %v113 = vunpack.c.l.b16 %v41
  %v114 = vunpack.c.l.b16 %v42
  %v115 = vunpack.c.l.b16 %v43
  %v116 = vunpack.c.l.b16 %v44
  %v117 = vunpack.c.l.b16 %v45
  %v118 = vunpack.c.l.b16 %v46
  %v119 = vunpack.c.l.b16 %v47
  %v120 = vunpack.c.l.b16 %v48
  %v121 = vunpack.c.l.b16 %v49
  %v122 = vunpack.c.l.b16 %v50
  %v123 = vunpack.c.l.b16 %v51
  %v124 = vunpack.c.l.b16 %v52
  %v125 = vunpack.c.l.b16 %v53
  %v126 = vunpack.c.l.b16 %v54
  %v127 = vunpack.c.l.b16 %v55
  %v128 = vunpack.c.l.b16 %v56
  %v129 = vunpack.c.l.b16 %v57
  %v130 = vunpack.c.l.b16 %v58
  %v131 = vunpack.c.l.b16 %v59
  %v132 = vunpack.c.l.b16 %v60
  %v133 = vunpack.c.l.b16 %v61
  %v134 = vunpack.c.l.b16 %v62
  %v135 = vunpack.c.l.b16 %v63
  %v136 = vunpack.c.l.b16 %v64
  %v137 = vunpack.c.l.b16 %v65
  %v138 = vunpack.c.l.b16 %v66
  %v139 = vunpack.c.l.b16 %v67
  %v140 = vunpack.c.l.b16 %v68
  %v141 = vunpack.c.l.b16 %v69
  %v142 = vpack.c.b16 %v108, %v107
  %v143 = vpack.c.b16 %v110, %v109
  %v144 = vpack.c.b16 %v112, %v111
  %v145 = vpack.c.b16 %v114, %v113
  %v146 = vpack.c.b16 %v116, %v115
  %v147 = vpack.c.b16 %v118, %v117
  %v148 = vpack.c.b16 %v120, %v119
  %v149 = vpack.c.b16 %v122, %v121
  %v150 = vpack.c.b16 %v124, %v123
  %v151 = vpack.c.b16 %v126, %v125
  %v152 = vpack.c.b16 %v128, %v127
  %v153 = vpack.c.b16 %v130, %v129
  %v154 = vpack.c.b16 %v132, %v131
  %v155 = vpack.c.b16 %v134, %v133
  %v156 = vpack.c.b16 %v136, %v135
  %v157 = vpack.c.b16 %v138, %v137
  %v158 = vpack.c.b16 %v140, %v139
  %v159 = vpack.c.b16 %v141, %v141
  %vm160 = vcmask 64512
  %v162 = vsel %vm160, %v142, 0
  %v165 = vsel %vm160, %v143, 0
  %v168 = vsel %vm160, %v144, 0
  %v171 = vsel %vm160, %v145, 0
  %v174 = vsel %vm160, %v146, 0
  %v177 = vsel %vm160, %v147, 0
  %v180 = vsel %vm160, %v148, 0
  %v183 = vsel %vm160, %v149, 0
  %v186 = vsel %vm160, %v150, 0
  %v189 = vsel %vm160, %v151, 0
  %v192 = vsel %vm160, %v152, 0
  %v195 = vsel %vm160, %v153, 0
  %v198 = vsel %vm160, %v154, 0
  %v201 = vsel %vm160, %v155, 0
  %v204 = vsel %vm160, %v156, 0
  %v207 = vsel %vm160, %v157, 0
  %v210 = vsel %vm160, %v158, 0
  %v213 = vsel %vm160, %v159, 0
  %vm215 = vcmask 1043456
  %v217 = vsel %vm215, %v70, 0
  %219 = vmatpush.bf16.msra.mxu0 0
  %220 = vmatpush.bf16.msra.mxu0 0
  %221 = vmatpush.bf16.msra.mxu0 0
  %222 = vmatpush.bf16.msra.mxu0 0
  %223 = vmatpush.bf16.msra.mxu0 0
  %224 = vmatpush.bf16.msra.mxu0 0
  %225 = vmatpush.bf16.msra.mxu0 0
  %226 = vmatpush.bf16.msra.mxu0 %v217
  %227 = vmatmul.bf16.gmra.mxu0 %v162
  %v228 = vpop.f32.mrf.mxu0
  %v229 = vadd.f32 %v71, %v228
  %v230 = vpop.f32.mrf.mxu0
  %v231 = vadd.f32 %v71, %v230
  %232 = vmatmul.bf16.gmra.mxu0 %v165
  %v233 = vpop.f32.mrf.mxu0
  %v234 = vadd.f32 %v71, %v233
  %v235 = vpop.f32.mrf.mxu0
  %v236 = vadd.f32 %v71, %v235
  %237 = vmatmul.bf16.gmra.mxu0 %v168
  %v238 = vpop.f32.mrf.mxu0
  %v239 = vadd.f32 %v71, %v238
  %v240 = vpop.f32.mrf.mxu0
  %v241 = vadd.f32 %v71, %v240
  %242 = vmatmul.bf16.gmra.mxu0 %v171
  %v243 = vpop.f32.mrf.mxu0
  %v244 = vadd.f32 %v71, %v243
  %v245 = vpop.f32.mrf.mxu0
  %v246 = vadd.f32 %v71, %v245
  %247 = vmatmul.bf16.gmra.mxu0 %v174
  %v248 = vpop.f32.mrf.mxu0
  %v249 = vadd.f32 %v71, %v248
  %v250 = vpop.f32.mrf.mxu0
  %v251 = vadd.f32 %v71, %v250
  %252 = vmatmul.bf16.gmra.mxu0 %v177
  %v253 = vpop.f32.mrf.mxu0
  %v254 = vadd.f32 %v71, %v253
  %v255 = vpop.f32.mrf.mxu0
  %v256 = vadd.f32 %v71, %v255
  %257 = vmatmul.bf16.gmra.mxu0 %v180
  %v258 = vpop.f32.mrf.mxu0
  %v259 = vadd.f32 %v71, %v258
  %v260 = vpop.f32.mrf.mxu0
  %v261 = vadd.f32 %v71, %v260
  %262 = vmatmul.bf16.gmra.mxu0 %v183
  %v263 = vpop.f32.mrf.mxu0
  %v264 = vadd.f32 %v71, %v263
  %v265 = vpop.f32.mrf.mxu0
  %v266 = vadd.f32 %v71, %v265
  %267 = vmatmul.bf16.gmra.mxu0 %v186
  %v268 = vpop.f32.mrf.mxu0
  %v269 = vadd.f32 %v71, %v268
  %v270 = vpop.f32.mrf.mxu0
  %v271 = vadd.f32 %v71, %v270
  %272 = vmatmul.bf16.gmra.mxu0 %v189
  %v273 = vpop.f32.mrf.mxu0
  %v274 = vadd.f32 %v71, %v273
  %v275 = vpop.f32.mrf.mxu0
  %v276 = vadd.f32 %v71, %v275
  %277 = vmatmul.bf16.gmra.mxu0 %v192
  %v278 = vpop.f32.mrf.mxu0
  %v279 = vadd.f32 %v71, %v278
  %v280 = vpop.f32.mrf.mxu0
  %v281 = vadd.f32 %v71, %v280
  %282 = vmatmul.bf16.gmra.mxu0 %v195
  %v283 = vpop.f32.mrf.mxu0
  %v284 = vadd.f32 %v71, %v283
  %v285 = vpop.f32.mrf.mxu0
  %v286 = vadd.f32 %v71, %v285
  %287 = vmatmul.bf16.gmra.mxu0 %v198
  %v288 = vpop.f32.mrf.mxu0
  %v289 = vadd.f32 %v71, %v288
  %v290 = vpop.f32.mrf.mxu0
  %v291 = vadd.f32 %v71, %v290
  %292 = vmatmul.bf16.gmra.mxu0 %v201
  %v293 = vpop.f32.mrf.mxu0
  %v294 = vadd.f32 %v71, %v293
  %v295 = vpop.f32.mrf.mxu0
  %v296 = vadd.f32 %v71, %v295
  %297 = vmatmul.bf16.gmra.mxu0 %v204
  %v298 = vpop.f32.mrf.mxu0
  %v299 = vadd.f32 %v71, %v298
  %v300 = vpop.f32.mrf.mxu0
  %v301 = vadd.f32 %v71, %v300
  %302 = vmatmul.bf16.gmra.mxu0 %v207
  %v303 = vpop.f32.mrf.mxu0
  %v304 = vadd.f32 %v71, %v303
  %v305 = vpop.f32.mrf.mxu0
  %v306 = vadd.f32 %v71, %v305
  %307 = vmatmul.bf16.gmra.mxu0 %v210
  %v308 = vpop.f32.mrf.mxu0
  %v309 = vadd.f32 %v71, %v308
  %v310 = vpop.f32.mrf.mxu0
  %v311 = vadd.f32 %v71, %v310
  %312 = vmatmul.bf16.gmra.mxu0 %v213
  %v313 = vpop.f32.mrf.mxu0
  %v314 = vadd.f32 %v71, %v313
  %v315 = vpop.f32.mrf.mxu0
  %316 = vdwg.mxu0
  %v317 = vmax.f32 %v229, 0.0
  %v318 = vmax.f32 %v231, 0.0
  %v319 = vmax.f32 %v234, 0.0
  %v320 = vmax.f32 %v236, 0.0
  %v321 = vmax.f32 %v239, 0.0
  %v322 = vmax.f32 %v241, 0.0
  %v323 = vmax.f32 %v244, 0.0
  %v324 = vmax.f32 %v246, 0.0
  %v325 = vmax.f32 %v249, 0.0
  %v326 = vmax.f32 %v251, 0.0
  %v327 = vmax.f32 %v254, 0.0
  %v328 = vmax.f32 %v256, 0.0
  %v329 = vmax.f32 %v259, 0.0
  %v330 = vmax.f32 %v261, 0.0
  %v331 = vmax.f32 %v264, 0.0
  %v332 = vmax.f32 %v266, 0.0
  %v333 = vmax.f32 %v269, 0.0
  %v334 = vmax.f32 %v271, 0.0
  %v335 = vmax.f32 %v274, 0.0
  %v336 = vmax.f32 %v276, 0.0
  %v337 = vmax.f32 %v279, 0.0
  %v338 = vmax.f32 %v281, 0.0
  %v339 = vmax.f32 %v284, 0.0
  %v340 = vmax.f32 %v286, 0.0
  %v341 = vmax.f32 %v289, 0.0
  %v342 = vmax.f32 %v291, 0.0
  %v343 = vmax.f32 %v294, 0.0
  %v344 = vmax.f32 %v296, 0.0
  %v345 = vmax.f32 %v299, 0.0
  %v346 = vmax.f32 %v301, 0.0
  %v347 = vmax.f32 %v304, 0.0
  %v348 = vmax.f32 %v306, 0.0
  %v349 = vmax.f32 %v309, 0.0
  %v350 = vmax.f32 %v311, 0.0
  %v351 = vmax.f32 %v314, 0.0
  %v352 = vperm.slane %v30, 1
  %v353 = vmul.f32 %v317, %v352
  %v354 = vmul.f32 %v318, %v352
  %v355 = vmul.f32 %v319, %v352
  %v356 = vmul.f32 %v320, %v352
  %v357 = vmul.f32 %v321, %v352
  %v358 = vmul.f32 %v322, %v352
  %v359 = vmul.f32 %v323, %v352
  %v360 = vmul.f32 %v324, %v352
  %v361 = vmul.f32 %v325, %v352
  %v362 = vmul.f32 %v326, %v352
  %v363 = vmul.f32 %v327, %v352
  %v364 = vmul.f32 %v328, %v352
  %v365 = vmul.f32 %v329, %v352
  %v366 = vmul.f32 %v330, %v352
  %v367 = vmul.f32 %v331, %v352
  %v368 = vmul.f32 %v332, %v352
  %v369 = vmul.f32 %v333, %v352
  %v370 = vmul.f32 %v334, %v352
  %v371 = vmul.f32 %v335, %v352
  %v372 = vmul.f32 %v336, %v352
  %v373 = vmul.f32 %v337, %v352
  %v374 = vmul.f32 %v338, %v352
  %v375 = vmul.f32 %v339, %v352
  %v376 = vmul.f32 %v340, %v352
  %v377 = vmul.f32 %v341, %v352
  %v378 = vmul.f32 %v342, %v352
  %v379 = vmul.f32 %v343, %v352
  %v380 = vmul.f32 %v344, %v352
  %v381 = vmul.f32 %v345, %v352
  %v382 = vmul.f32 %v346, %v352
  %v383 = vmul.f32 %v347, %v352
  %v384 = vmul.f32 %v348, %v352
  %v385 = vmul.f32 %v349, %v352
  %v386 = vmul.f32 %v350, %v352
  %v387 = vmul.f32 %v351, %v352
  %v388 = vperm.slane %v30, 2
  %v389 = vadd.f32 %v353, %v388
  %v390 = vadd.f32 %v354, %v388
  %v391 = vadd.f32 %v355, %v388
  %v392 = vadd.f32 %v356, %v388
  %v393 = vadd.f32 %v357, %v388
  %v394 = vadd.f32 %v358, %v388
  %v395 = vadd.f32 %v359, %v388
  %v396 = vadd.f32 %v360, %v388
  %v397 = vadd.f32 %v361, %v388
  %v398 = vadd.f32 %v362, %v388
  %v399 = vadd.f32 %v363, %v388
  %v400 = vadd.f32 %v364, %v388
  %v401 = vadd.f32 %v365, %v388
  %v402 = vadd.f32 %v366, %v388
  %v403 = vadd.f32 %v367, %v388
  %v404 = vadd.f32 %v368, %v388
  %v405 = vadd.f32 %v369, %v388
  %v406 = vadd.f32 %v370, %v388
  %v407 = vadd.f32 %v371, %v388
  %v408 = vadd.f32 %v372, %v388
  %v409 = vadd.f32 %v373, %v388
  %v410 = vadd.f32 %v374, %v388
  %v411 = vadd.f32 %v375, %v388
  %v412 = vadd.f32 %v376, %v388
  %v413 = vadd.f32 %v377, %v388
  %v414 = vadd.f32 %v378, %v388
  %v415 = vadd.f32 %v379, %v388
  %v416 = vadd.f32 %v380, %v388
  %v417 = vadd.f32 %v381, %v388
  %v418 = vadd.f32 %v382, %v388
  %v419 = vadd.f32 %v383, %v388
  %v420 = vadd.f32 %v384, %v388
  %v421 = vadd.f32 %v385, %v388
  %v422 = vadd.f32 %v386, %v388
  %v423 = vadd.f32 %v387, %v388
  %v424 = vld [vmem:[%s2] sm:$0xff]
  %v425 = vld [vmem:[%s2 + $0x8] sm:$0xff]
  %v426 = vld [vmem:[%s2 + $0x10] sm:$0xff]
  %v427 = vld [vmem:[%s2 + $0x18] sm:$0xff]
  %v428 = vld [vmem:[%s2 + $0x20] sm:$0xff]
  %v429 = vld [vmem:[%s2 + $0x28] sm:$0xff]
  %v430 = vld [vmem:[%s2 + $0x30] sm:$0xff]
  %v431 = vld [vmem:[%s2 + $0x38] sm:$0xff]
  %v433 = vsel %vm160, %v396, 0
  %v436 = vsel %vm160, %v397, 0
  %v439 = vsel %vm160, %v398, 0
  %v442 = vsel %vm160, %v399, 0
  %v445 = vsel %vm160, %v403, 0
  %v448 = vsel %vm160, %v404, 0
  %v451 = vsel %vm160, %v405, 0
  %v454 = vsel %vm160, %v406, 0
  %v457 = vsel %vm160, %v410, 0
  %v460 = vsel %vm160, %v411, 0
  %v463 = vsel %vm160, %v412, 0
  %v466 = vsel %vm160, %v413, 0
  %v469 = vsel %vm160, %v417, 0
  %v472 = vsel %vm160, %v418, 0
  %v475 = vsel %vm160, %v419, 0
  %v478 = vsel %vm160, %v420, 0
  %480 = vmatpush.msra.mxu0 0.0
  %481 = vmatpush.msra.mxu0 0.0
  %482 = vmatpush.msra.mxu0 0.0
  %483 = vmatpush.msra.mxu0 0.0
  %484 = vmatpush.msra.mxu0 0.0
  %485 = vmatpush.msra.mxu0 0.0
  %486 = vmatpush.msra.mxu0 0.0
  %487 = vmatpush.msra.mxu0 0.0
  %488 = vmatpush.msra.mxu0 0.0
  %489 = vmatpush.msra.mxu0 0.0
  %490 = vmatpush.msra.mxu0 0.0
  %491 = vmatpush.msra.mxu0 0.0
  %492 = vmatpush.msra.mxu0 0.0
  %493 = vmatpush.msra.mxu0 0.0
  %494 = vmatpush.msra.mxu0 0.0
  %495 = vmatpush.msra.mxu0 %v425
  %496 = vmatmul.f32.gmra.mxu0 %v433
  %v497 = vpop.f32.mrf.mxu0
  %v498 = vadd.f32 0.0, %v497
  %499 = vmatmul.f32.gmra.mxu0 %v436
  %v500 = vpop.f32.mrf.mxu0
  %v501 = vadd.f32 0.0, %v500
  %502 = vmatmul.f32.gmra.mxu0 %v439
  %v503 = vpop.f32.mrf.mxu0
  %v504 = vadd.f32 0.0, %v503
  %505 = vmatmul.f32.gmra.mxu0 %v442
  %v506 = vpop.f32.mrf.mxu0
  %v507 = vadd.f32 0.0, %v506
  %508 = vmatmul.f32.gmra.mxu0 %v445
  %v509 = vpop.f32.mrf.mxu0
  %v510 = vadd.f32 0.0, %v509
  %511 = vmatmul.f32.gmra.mxu0 %v448
  %v512 = vpop.f32.mrf.mxu0
  %v513 = vadd.f32 0.0, %v512
  %514 = vmatmul.f32.gmra.mxu0 %v451
  %v515 = vpop.f32.mrf.mxu0
  %v516 = vadd.f32 0.0, %v515
  %517 = vmatmul.f32.gmra.mxu0 %v454
  %v518 = vpop.f32.mrf.mxu0
  %v519 = vadd.f32 0.0, %v518
  %520 = vmatmul.f32.gmra.mxu0 %v457
  %v521 = vpop.f32.mrf.mxu0
  %v522 = vadd.f32 0.0, %v521
  %523 = vmatmul.f32.gmra.mxu0 %v460
  %v524 = vpop.f32.mrf.mxu0
  %v525 = vadd.f32 0.0, %v524
  %526 = vmatmul.f32.gmra.mxu0 %v463
  %v527 = vpop.f32.mrf.mxu0
  %v528 = vadd.f32 0.0, %v527
  %529 = vmatmul.f32.gmra.mxu0 %v466
  %v530 = vpop.f32.mrf.mxu0
  %v531 = vadd.f32 0.0, %v530
  %532 = vmatmul.f32.gmra.mxu0 %v469
  %v533 = vpop.f32.mrf.mxu0
  %v534 = vadd.f32 0.0, %v533
  %535 = vmatmul.f32.gmra.mxu0 %v472
  %v536 = vpop.f32.mrf.mxu0
  %v537 = vadd.f32 0.0, %v536
  %538 = vmatmul.f32.gmra.mxu0 %v475
  %v539 = vpop.f32.mrf.mxu0
  %v540 = vadd.f32 0.0, %v539
  %541 = vmatmul.f32.gmra.mxu0 %v478
  %v542 = vpop.f32.mrf.mxu0
  %v543 = vadd.f32 0.0, %v542
  %544 = vdwg.mxu0
  %v546 = vsel %vm160, %v389, 0
  %v549 = vsel %vm160, %v390, 0
  %v552 = vsel %vm160, %v391, 0
  %v555 = vsel %vm160, %v392, 0
  %557 = vmatpush.msra.mxu0 0.0
  %558 = vmatpush.msra.mxu0 0.0
  %559 = vmatpush.msra.mxu0 0.0
  %560 = vmatpush.msra.mxu0 0.0
  %561 = vmatpush.msra.mxu0 0.0
  %562 = vmatpush.msra.mxu0 0.0
  %563 = vmatpush.msra.mxu0 0.0
  %564 = vmatpush.msra.mxu0 0.0
  %565 = vmatpush.msra.mxu0 0.0
  %566 = vmatpush.msra.mxu0 0.0
  %567 = vmatpush.msra.mxu0 0.0
  %568 = vmatpush.msra.mxu0 0.0
  %569 = vmatpush.msra.mxu0 0.0
  %570 = vmatpush.msra.mxu0 0.0
  %571 = vmatpush.msra.mxu0 0.0
  %572 = vmatpush.msra.mxu0 %v424
  %573 = vmatmul.f32.gmra.mxu0 %v546
  %v574 = vpop.f32.mrf.mxu0
  %v575 = vadd.f32 %v498, %v574
  %576 = vmatmul.f32.gmra.mxu0 %v549
  %v577 = vpop.f32.mrf.mxu0
  %v578 = vadd.f32 %v501, %v577
  %579 = vmatmul.f32.gmra.mxu0 %v552
  %v580 = vpop.f32.mrf.mxu0
  %v581 = vadd.f32 %v504, %v580
  %582 = vmatmul.f32.gmra.mxu0 %v555
  %v583 = vpop.f32.mrf.mxu0
  %v584 = vadd.f32 %v507, %v583
  %585 = vmatmul.f32.gmra.mxu0 %v433
  %v586 = vpop.f32.mrf.mxu0
  %v587 = vadd.f32 %v510, %v586
  %588 = vmatmul.f32.gmra.mxu0 %v436
  %v589 = vpop.f32.mrf.mxu0
  %v590 = vadd.f32 %v513, %v589
  %591 = vmatmul.f32.gmra.mxu0 %v439
  %v592 = vpop.f32.mrf.mxu0
  %v593 = vadd.f32 %v516, %v592
  %594 = vmatmul.f32.gmra.mxu0 %v442
  %v595 = vpop.f32.mrf.mxu0
  %v596 = vadd.f32 %v519, %v595
  %597 = vmatmul.f32.gmra.mxu0 %v445
  %v598 = vpop.f32.mrf.mxu0
  %v599 = vadd.f32 %v522, %v598
  %600 = vmatmul.f32.gmra.mxu0 %v448
  %v601 = vpop.f32.mrf.mxu0
  %v602 = vadd.f32 %v525, %v601
  %603 = vmatmul.f32.gmra.mxu0 %v451
  %v604 = vpop.f32.mrf.mxu0
  %v605 = vadd.f32 %v528, %v604
  %606 = vmatmul.f32.gmra.mxu0 %v454
  %v607 = vpop.f32.mrf.mxu0
  %v608 = vadd.f32 %v531, %v607
  %609 = vmatmul.f32.gmra.mxu0 %v457
  %v610 = vpop.f32.mrf.mxu0
  %v611 = vadd.f32 %v534, %v610
  %612 = vmatmul.f32.gmra.mxu0 %v460
  %v613 = vpop.f32.mrf.mxu0
  %v614 = vadd.f32 %v537, %v613
  %615 = vmatmul.f32.gmra.mxu0 %v463
  %v616 = vpop.f32.mrf.mxu0
  %v617 = vadd.f32 %v540, %v616
  %618 = vmatmul.f32.gmra.mxu0 %v466
  %v619 = vpop.f32.mrf.mxu0
  %v620 = vadd.f32 %v543, %v619
  %621 = vdwg.mxu0
  %v623 = vsel %vm160, %v393, 0
  %v626 = vsel %vm160, %v400, 0
  %v629 = vsel %vm160, %v407, 0
  %v632 = vsel %vm160, %v414, 0
  %634 = vmatpush.msra.mxu0 0.0
  %635 = vmatpush.msra.mxu0 0.0
  %636 = vmatpush.msra.mxu0 0.0
  %637 = vmatpush.msra.mxu0 0.0
  %638 = vmatpush.msra.mxu0 0.0
  %639 = vmatpush.msra.mxu0 0.0
  %640 = vmatpush.msra.mxu0 0.0
  %641 = vmatpush.msra.mxu0 0.0
  %642 = vmatpush.msra.mxu0 0.0
  %643 = vmatpush.msra.mxu0 0.0
  %644 = vmatpush.msra.mxu0 0.0
  %645 = vmatpush.msra.mxu0 0.0
  %646 = vmatpush.msra.mxu0 0.0
  %647 = vmatpush.msra.mxu0 0.0
  %648 = vmatpush.msra.mxu0 0.0
  %649 = vmatpush.msra.mxu0 %v426
  %650 = vmatmul.f32.gmra.mxu0 %v549
  %v651 = vpop.f32.mrf.mxu0
  %v652 = vadd.f32 0.0, %v651
  %653 = vmatmul.f32.gmra.mxu0 %v552
  %v654 = vpop.f32.mrf.mxu0
  %v655 = vadd.f32 0.0, %v654
  %656 = vmatmul.f32.gmra.mxu0 %v555
  %v657 = vpop.f32.mrf.mxu0
  %v658 = vadd.f32 0.0, %v657
  %659 = vmatmul.f32.gmra.mxu0 %v623
  %v660 = vpop.f32.mrf.mxu0
  %v661 = vadd.f32 0.0, %v660
  %662 = vmatmul.f32.gmra.mxu0 %v436
  %v663 = vpop.f32.mrf.mxu0
  %v664 = vadd.f32 0.0, %v663
  %665 = vmatmul.f32.gmra.mxu0 %v439
  %v666 = vpop.f32.mrf.mxu0
  %v667 = vadd.f32 0.0, %v666
  %668 = vmatmul.f32.gmra.mxu0 %v442
  %v669 = vpop.f32.mrf.mxu0
  %v670 = vadd.f32 0.0, %v669
  %671 = vmatmul.f32.gmra.mxu0 %v626
  %v672 = vpop.f32.mrf.mxu0
  %v673 = vadd.f32 0.0, %v672
  %674 = vmatmul.f32.gmra.mxu0 %v448
  %v675 = vpop.f32.mrf.mxu0
  %v676 = vadd.f32 0.0, %v675
  %677 = vmatmul.f32.gmra.mxu0 %v451
  %v678 = vpop.f32.mrf.mxu0
  %v679 = vadd.f32 0.0, %v678
  %680 = vmatmul.f32.gmra.mxu0 %v454
  %v681 = vpop.f32.mrf.mxu0
  %v682 = vadd.f32 0.0, %v681
  %683 = vmatmul.f32.gmra.mxu0 %v629
  %v684 = vpop.f32.mrf.mxu0
  %v685 = vadd.f32 0.0, %v684
  %686 = vmatmul.f32.gmra.mxu0 %v460
  %v687 = vpop.f32.mrf.mxu0
  %v688 = vadd.f32 0.0, %v687
  %689 = vmatmul.f32.gmra.mxu0 %v463
  %v690 = vpop.f32.mrf.mxu0
  %v691 = vadd.f32 0.0, %v690
  %692 = vmatmul.f32.gmra.mxu0 %v466
  %v693 = vpop.f32.mrf.mxu0
  %v694 = vadd.f32 0.0, %v693
  %695 = vmatmul.f32.gmra.mxu0 %v632
  %v696 = vpop.f32.mrf.mxu0
  %v697 = vadd.f32 0.0, %v696
  %698 = vdwg.mxu0
  %v699 = vadd.f32 %v575, %v652
  %v700 = vadd.f32 %v578, %v655
  %v701 = vadd.f32 %v581, %v658
  %v702 = vadd.f32 %v584, %v661
  %v703 = vadd.f32 %v587, %v664
  %v704 = vadd.f32 %v590, %v667
  %v705 = vadd.f32 %v593, %v670
  %v706 = vadd.f32 %v596, %v673
  %v707 = vadd.f32 %v599, %v676
  %v708 = vadd.f32 %v602, %v679
  %v709 = vadd.f32 %v605, %v682
  %v710 = vadd.f32 %v608, %v685
  %v711 = vadd.f32 %v611, %v688
  %v712 = vadd.f32 %v614, %v691
  %v713 = vadd.f32 %v617, %v694
  %v714 = vadd.f32 %v620, %v697
  %v716 = vsel %vm160, %v421, 0
  %718 = vmatpush.msra.mxu0 0.0
  %719 = vmatpush.msra.mxu0 0.0
  %720 = vmatpush.msra.mxu0 0.0
  %721 = vmatpush.msra.mxu0 0.0
  %722 = vmatpush.msra.mxu0 0.0
  %723 = vmatpush.msra.mxu0 0.0
  %724 = vmatpush.msra.mxu0 0.0
  %725 = vmatpush.msra.mxu0 0.0
  %726 = vmatpush.msra.mxu0 0.0
  %727 = vmatpush.msra.mxu0 0.0
  %728 = vmatpush.msra.mxu0 0.0
  %729 = vmatpush.msra.mxu0 0.0
  %730 = vmatpush.msra.mxu0 0.0
  %731 = vmatpush.msra.mxu0 0.0
  %732 = vmatpush.msra.mxu0 0.0
  %733 = vmatpush.msra.mxu0 %v427
  %734 = vmatmul.f32.gmra.mxu0 %v436
  %v735 = vpop.f32.mrf.mxu0
  %v736 = vadd.f32 0.0, %v735
  %737 = vmatmul.f32.gmra.mxu0 %v439
  %v738 = vpop.f32.mrf.mxu0
  %v739 = vadd.f32 0.0, %v738
  %740 = vmatmul.f32.gmra.mxu0 %v442
  %v741 = vpop.f32.mrf.mxu0
  %v742 = vadd.f32 0.0, %v741
  %743 = vmatmul.f32.gmra.mxu0 %v626
  %v744 = vpop.f32.mrf.mxu0
  %v745 = vadd.f32 0.0, %v744
  %746 = vmatmul.f32.gmra.mxu0 %v448
  %v747 = vpop.f32.mrf.mxu0
  %v748 = vadd.f32 0.0, %v747
  %749 = vmatmul.f32.gmra.mxu0 %v451
  %v750 = vpop.f32.mrf.mxu0
  %v751 = vadd.f32 0.0, %v750
  %752 = vmatmul.f32.gmra.mxu0 %v454
  %v753 = vpop.f32.mrf.mxu0
  %v754 = vadd.f32 0.0, %v753
  %755 = vmatmul.f32.gmra.mxu0 %v629
  %v756 = vpop.f32.mrf.mxu0
  %v757 = vadd.f32 0.0, %v756
  %758 = vmatmul.f32.gmra.mxu0 %v460
  %v759 = vpop.f32.mrf.mxu0
  %v760 = vadd.f32 0.0, %v759
  %761 = vmatmul.f32.gmra.mxu0 %v463
  %v762 = vpop.f32.mrf.mxu0
  %v763 = vadd.f32 0.0, %v762
  %764 = vmatmul.f32.gmra.mxu0 %v466
  %v765 = vpop.f32.mrf.mxu0
  %v766 = vadd.f32 0.0, %v765
  %767 = vmatmul.f32.gmra.mxu0 %v632
  %v768 = vpop.f32.mrf.mxu0
  %v769 = vadd.f32 0.0, %v768
  %770 = vmatmul.f32.gmra.mxu0 %v472
  %v771 = vpop.f32.mrf.mxu0
  %v772 = vadd.f32 0.0, %v771
  %773 = vmatmul.f32.gmra.mxu0 %v475
  %v774 = vpop.f32.mrf.mxu0
  %v775 = vadd.f32 0.0, %v774
  %776 = vmatmul.f32.gmra.mxu0 %v478
  %v777 = vpop.f32.mrf.mxu0
  %v778 = vadd.f32 0.0, %v777
  %779 = vmatmul.f32.gmra.mxu0 %v716
  %v780 = vpop.f32.mrf.mxu0
  %v781 = vadd.f32 0.0, %v780
  %782 = vdwg.mxu0
  %v783 = vadd.f32 %v699, %v736
  %v784 = vadd.f32 %v700, %v739
  %v785 = vadd.f32 %v701, %v742
  %v786 = vadd.f32 %v702, %v745
  %v787 = vadd.f32 %v703, %v748
  %v788 = vadd.f32 %v704, %v751
  %v789 = vadd.f32 %v705, %v754
  %v790 = vadd.f32 %v706, %v757
  %v791 = vadd.f32 %v707, %v760
  %v792 = vadd.f32 %v708, %v763
  %v793 = vadd.f32 %v709, %v766
  %v794 = vadd.f32 %v710, %v769
  %v795 = vadd.f32 %v711, %v772
  %v796 = vadd.f32 %v712, %v775
  %v797 = vadd.f32 %v713, %v778
  %v798 = vadd.f32 %v714, %v781
  %v800 = vsel %vm160, %v394, 0
  %v803 = vsel %vm160, %v401, 0
  %v806 = vsel %vm160, %v408, 0
  %v809 = vsel %vm160, %v415, 0
  %811 = vmatpush.msra.mxu0 0.0
  %812 = vmatpush.msra.mxu0 0.0
  %813 = vmatpush.msra.mxu0 0.0
  %814 = vmatpush.msra.mxu0 0.0
  %815 = vmatpush.msra.mxu0 0.0
  %816 = vmatpush.msra.mxu0 0.0
  %817 = vmatpush.msra.mxu0 0.0
  %818 = vmatpush.msra.mxu0 0.0
  %819 = vmatpush.msra.mxu0 0.0
  %820 = vmatpush.msra.mxu0 0.0
  %821 = vmatpush.msra.mxu0 0.0
  %822 = vmatpush.msra.mxu0 0.0
  %823 = vmatpush.msra.mxu0 0.0
  %824 = vmatpush.msra.mxu0 0.0
  %825 = vmatpush.msra.mxu0 0.0
  %826 = vmatpush.msra.mxu0 %v428
  %827 = vmatmul.f32.gmra.mxu0 %v552
  %v828 = vpop.f32.mrf.mxu0
  %v829 = vadd.f32 0.0, %v828
  %830 = vmatmul.f32.gmra.mxu0 %v555
  %v831 = vpop.f32.mrf.mxu0
  %v832 = vadd.f32 0.0, %v831
  %833 = vmatmul.f32.gmra.mxu0 %v623
  %v834 = vpop.f32.mrf.mxu0
  %v835 = vadd.f32 0.0, %v834
  %836 = vmatmul.f32.gmra.mxu0 %v800
  %v837 = vpop.f32.mrf.mxu0
  %v838 = vadd.f32 0.0, %v837
  %839 = vmatmul.f32.gmra.mxu0 %v439
  %v840 = vpop.f32.mrf.mxu0
  %v841 = vadd.f32 0.0, %v840
  %842 = vmatmul.f32.gmra.mxu0 %v442
  %v843 = vpop.f32.mrf.mxu0
  %v844 = vadd.f32 0.0, %v843
  %845 = vmatmul.f32.gmra.mxu0 %v626
  %v846 = vpop.f32.mrf.mxu0
  %v847 = vadd.f32 0.0, %v846
  %848 = vmatmul.f32.gmra.mxu0 %v803
  %v849 = vpop.f32.mrf.mxu0
  %v850 = vadd.f32 0.0, %v849
  %851 = vmatmul.f32.gmra.mxu0 %v451
  %v852 = vpop.f32.mrf.mxu0
  %v853 = vadd.f32 0.0, %v852
  %854 = vmatmul.f32.gmra.mxu0 %v454
  %v855 = vpop.f32.mrf.mxu0
  %v856 = vadd.f32 0.0, %v855
  %857 = vmatmul.f32.gmra.mxu0 %v629
  %v858 = vpop.f32.mrf.mxu0
  %v859 = vadd.f32 0.0, %v858
  %860 = vmatmul.f32.gmra.mxu0 %v806
  %v861 = vpop.f32.mrf.mxu0
  %v862 = vadd.f32 0.0, %v861
  %863 = vmatmul.f32.gmra.mxu0 %v463
  %v864 = vpop.f32.mrf.mxu0
  %v865 = vadd.f32 0.0, %v864
  %866 = vmatmul.f32.gmra.mxu0 %v466
  %v867 = vpop.f32.mrf.mxu0
  %v868 = vadd.f32 0.0, %v867
  %869 = vmatmul.f32.gmra.mxu0 %v632
  %v870 = vpop.f32.mrf.mxu0
  %v871 = vadd.f32 0.0, %v870
  %872 = vmatmul.f32.gmra.mxu0 %v809
  %v873 = vpop.f32.mrf.mxu0
  %v874 = vadd.f32 0.0, %v873
  %875 = vdwg.mxu0
  %v876 = vadd.f32 %v783, %v829
  %v877 = vadd.f32 %v784, %v832
  %v878 = vadd.f32 %v785, %v835
  %v879 = vadd.f32 %v786, %v838
  %v880 = vadd.f32 %v787, %v841
  %v881 = vadd.f32 %v788, %v844
  %v882 = vadd.f32 %v789, %v847
  %v883 = vadd.f32 %v790, %v850
  %v884 = vadd.f32 %v791, %v853
  %v885 = vadd.f32 %v792, %v856
  %v886 = vadd.f32 %v793, %v859
  %v887 = vadd.f32 %v794, %v862
  %v888 = vadd.f32 %v795, %v865
  %v889 = vadd.f32 %v796, %v868
  %v890 = vadd.f32 %v797, %v871
  %v891 = vadd.f32 %v798, %v874
  %v893 = vsel %vm160, %v422, 0
  %895 = vmatpush.msra.mxu0 0.0
  %896 = vmatpush.msra.mxu0 0.0
  %897 = vmatpush.msra.mxu0 0.0
  %898 = vmatpush.msra.mxu0 0.0
  %899 = vmatpush.msra.mxu0 0.0
  %900 = vmatpush.msra.mxu0 0.0
  %901 = vmatpush.msra.mxu0 0.0
  %902 = vmatpush.msra.mxu0 0.0
  %903 = vmatpush.msra.mxu0 0.0
  %904 = vmatpush.msra.mxu0 0.0
  %905 = vmatpush.msra.mxu0 0.0
  %906 = vmatpush.msra.mxu0 0.0
  %907 = vmatpush.msra.mxu0 0.0
  %908 = vmatpush.msra.mxu0 0.0
  %909 = vmatpush.msra.mxu0 0.0
  %910 = vmatpush.msra.mxu0 %v429
  %911 = vmatmul.f32.gmra.mxu0 %v439
  %v912 = vpop.f32.mrf.mxu0
  %v913 = vadd.f32 0.0, %v912
  %914 = vmatmul.f32.gmra.mxu0 %v442
  %v915 = vpop.f32.mrf.mxu0
  %v916 = vadd.f32 0.0, %v915
  %917 = vmatmul.f32.gmra.mxu0 %v626
  %v918 = vpop.f32.mrf.mxu0
  %v919 = vadd.f32 0.0, %v918
  %920 = vmatmul.f32.gmra.mxu0 %v803
  %v921 = vpop.f32.mrf.mxu0
  %v922 = vadd.f32 0.0, %v921
  %923 = vmatmul.f32.gmra.mxu0 %v451
  %v924 = vpop.f32.mrf.mxu0
  %v925 = vadd.f32 0.0, %v924
  %926 = vmatmul.f32.gmra.mxu0 %v454
  %v927 = vpop.f32.mrf.mxu0
  %v928 = vadd.f32 0.0, %v927
  %929 = vmatmul.f32.gmra.mxu0 %v629
  %v930 = vpop.f32.mrf.mxu0
  %v931 = vadd.f32 0.0, %v930
  %932 = vmatmul.f32.gmra.mxu0 %v806
  %v933 = vpop.f32.mrf.mxu0
  %v934 = vadd.f32 0.0, %v933
  %935 = vmatmul.f32.gmra.mxu0 %v463
  %v936 = vpop.f32.mrf.mxu0
  %v937 = vadd.f32 0.0, %v936
  %938 = vmatmul.f32.gmra.mxu0 %v466
  %v939 = vpop.f32.mrf.mxu0
  %v940 = vadd.f32 0.0, %v939
  %941 = vmatmul.f32.gmra.mxu0 %v632
  %v942 = vpop.f32.mrf.mxu0
  %v943 = vadd.f32 0.0, %v942
  %944 = vmatmul.f32.gmra.mxu0 %v809
  %v945 = vpop.f32.mrf.mxu0
  %v946 = vadd.f32 0.0, %v945
  %947 = vmatmul.f32.gmra.mxu0 %v475
  %v948 = vpop.f32.mrf.mxu0
  %v949 = vadd.f32 0.0, %v948
  %950 = vmatmul.f32.gmra.mxu0 %v478
  %v951 = vpop.f32.mrf.mxu0
  %v952 = vadd.f32 0.0, %v951
  %953 = vmatmul.f32.gmra.mxu0 %v716
  %v954 = vpop.f32.mrf.mxu0
  %v955 = vadd.f32 0.0, %v954
  %956 = vmatmul.f32.gmra.mxu0 %v893
  %v957 = vpop.f32.mrf.mxu0
  %v958 = vadd.f32 0.0, %v957
  %959 = vdwg.mxu0
  %v960 = vadd.f32 %v876, %v913
  %v961 = vadd.f32 %v877, %v916
  %v962 = vadd.f32 %v878, %v919
  %v963 = vadd.f32 %v879, %v922
  %v964 = vadd.f32 %v880, %v925
  %v965 = vadd.f32 %v881, %v928
  %v966 = vadd.f32 %v882, %v931
  %v967 = vadd.f32 %v883, %v934
  %v968 = vadd.f32 %v884, %v937
  %v969 = vadd.f32 %v885, %v940
  %v970 = vadd.f32 %v886, %v943
  %v971 = vadd.f32 %v887, %v946
  %v972 = vadd.f32 %v888, %v949
  %v973 = vadd.f32 %v889, %v952
  %v974 = vadd.f32 %v890, %v955
  %v975 = vadd.f32 %v891, %v958
  %v977 = vsel %vm160, %v395, 0
  %v980 = vsel %vm160, %v402, 0
  %v983 = vsel %vm160, %v409, 0
  %v986 = vsel %vm160, %v416, 0
  %988 = vmatpush.msra.mxu0 0.0
  %989 = vmatpush.msra.mxu0 0.0
  %990 = vmatpush.msra.mxu0 0.0
  %991 = vmatpush.msra.mxu0 0.0
  %992 = vmatpush.msra.mxu0 0.0
  %993 = vmatpush.msra.mxu0 0.0
  %994 = vmatpush.msra.mxu0 0.0
  %995 = vmatpush.msra.mxu0 0.0
  %996 = vmatpush.msra.mxu0 0.0
  %997 = vmatpush.msra.mxu0 0.0
  %998 = vmatpush.msra.mxu0 0.0
  %999 = vmatpush.msra.mxu0 0.0
  %1000 = vmatpush.msra.mxu0 0.0
  %1001 = vmatpush.msra.mxu0 0.0
  %1002 = vmatpush.msra.mxu0 0.0
  %1003 = vmatpush.msra.mxu0 %v430
  %1004 = vmatmul.f32.gmra.mxu0 %v555
  %v1005 = vpop.f32.mrf.mxu0
  %v1006 = vadd.f32 0.0, %v1005
  %1007 = vmatmul.f32.gmra.mxu0 %v623
  %v1008 = vpop.f32.mrf.mxu0
  %v1009 = vadd.f32 0.0, %v1008
  %1010 = vmatmul.f32.gmra.mxu0 %v800
  %v1011 = vpop.f32.mrf.mxu0
  %v1012 = vadd.f32 0.0, %v1011
  %1013 = vmatmul.f32.gmra.mxu0 %v977
  %v1014 = vpop.f32.mrf.mxu0
  %v1015 = vadd.f32 0.0, %v1014
  %1016 = vmatmul.f32.gmra.mxu0 %v442
  %v1017 = vpop.f32.mrf.mxu0
  %v1018 = vadd.f32 0.0, %v1017
  %1019 = vmatmul.f32.gmra.mxu0 %v626
  %v1020 = vpop.f32.mrf.mxu0
  %v1021 = vadd.f32 0.0, %v1020
  %1022 = vmatmul.f32.gmra.mxu0 %v803
  %v1023 = vpop.f32.mrf.mxu0
  %v1024 = vadd.f32 0.0, %v1023
  %1025 = vmatmul.f32.gmra.mxu0 %v980
  %v1026 = vpop.f32.mrf.mxu0
  %v1027 = vadd.f32 0.0, %v1026
  %1028 = vmatmul.f32.gmra.mxu0 %v454
  %v1029 = vpop.f32.mrf.mxu0
  %v1030 = vadd.f32 0.0, %v1029
  %1031 = vmatmul.f32.gmra.mxu0 %v629
  %v1032 = vpop.f32.mrf.mxu0
  %v1033 = vadd.f32 0.0, %v1032
  %1034 = vmatmul.f32.gmra.mxu0 %v806
  %v1035 = vpop.f32.mrf.mxu0
  %v1036 = vadd.f32 0.0, %v1035
  %1037 = vmatmul.f32.gmra.mxu0 %v983
  %v1038 = vpop.f32.mrf.mxu0
  %v1039 = vadd.f32 0.0, %v1038
  %1040 = vmatmul.f32.gmra.mxu0 %v466
  %v1041 = vpop.f32.mrf.mxu0
  %v1042 = vadd.f32 0.0, %v1041
  %1043 = vmatmul.f32.gmra.mxu0 %v632
  %v1044 = vpop.f32.mrf.mxu0
  %v1045 = vadd.f32 0.0, %v1044
  %1046 = vmatmul.f32.gmra.mxu0 %v809
  %v1047 = vpop.f32.mrf.mxu0
  %v1048 = vadd.f32 0.0, %v1047
  %1049 = vmatmul.f32.gmra.mxu0 %v986
  %v1050 = vpop.f32.mrf.mxu0
  %v1051 = vadd.f32 0.0, %v1050
  %1052 = vdwg.mxu0
  %v1053 = vadd.f32 %v960, %v1006
  %v1054 = vadd.f32 %v961, %v1009
  %v1055 = vadd.f32 %v962, %v1012
  %v1056 = vadd.f32 %v963, %v1015
  %v1057 = vadd.f32 %v964, %v1018
  %v1058 = vadd.f32 %v965, %v1021
  %v1059 = vadd.f32 %v966, %v1024
  %v1060 = vadd.f32 %v967, %v1027
  %v1061 = vadd.f32 %v968, %v1030
  %v1062 = vadd.f32 %v969, %v1033
  %v1063 = vadd.f32 %v970, %v1036
  %v1064 = vadd.f32 %v971, %v1039
  %v1065 = vadd.f32 %v972, %v1042
  %v1066 = vadd.f32 %v973, %v1045
  %v1067 = vadd.f32 %v974, %v1048
  %v1068 = vadd.f32 %v975, %v1051
  %v1070 = vsel %vm160, %v423, 0
  %1072 = vmatpush.msra.mxu0 0.0
  %1073 = vmatpush.msra.mxu0 0.0
  %1074 = vmatpush.msra.mxu0 0.0
  %1075 = vmatpush.msra.mxu0 0.0
  %1076 = vmatpush.msra.mxu0 0.0
  %1077 = vmatpush.msra.mxu0 0.0
  %1078 = vmatpush.msra.mxu0 0.0
  %1079 = vmatpush.msra.mxu0 0.0
  %1080 = vmatpush.msra.mxu0 0.0
  %1081 = vmatpush.msra.mxu0 0.0
  %1082 = vmatpush.msra.mxu0 0.0
  %1083 = vmatpush.msra.mxu0 0.0
  %1084 = vmatpush.msra.mxu0 0.0
  %1085 = vmatpush.msra.mxu0 0.0
  %1086 = vmatpush.msra.mxu0 0.0
  %1087 = vmatpush.msra.mxu0 %v431
  %1088 = vmatmul.f32.gmra.mxu0 %v442
  %v1089 = vpop.f32.mrf.mxu0
  %v1090 = vadd.f32 0.0, %v1089
  %1091 = vmatmul.f32.gmra.mxu0 %v626
  %v1092 = vpop.f32.mrf.mxu0
  %v1093 = vadd.f32 0.0, %v1092
  %1094 = vmatmul.f32.gmra.mxu0 %v803
  %v1095 = vpop.f32.mrf.mxu0
  %v1096 = vadd.f32 0.0, %v1095
  %1097 = vmatmul.f32.gmra.mxu0 %v980
  %v1098 = vpop.f32.mrf.mxu0
  %v1099 = vadd.f32 0.0, %v1098
  %1100 = vmatmul.f32.gmra.mxu0 %v454
  %v1101 = vpop.f32.mrf.mxu0
  %v1102 = vadd.f32 0.0, %v1101
  %1103 = vmatmul.f32.gmra.mxu0 %v629
  %v1104 = vpop.f32.mrf.mxu0
  %v1105 = vadd.f32 0.0, %v1104
  %1106 = vmatmul.f32.gmra.mxu0 %v806
  %v1107 = vpop.f32.mrf.mxu0
  %v1108 = vadd.f32 0.0, %v1107
  %1109 = vmatmul.f32.gmra.mxu0 %v983
  %v1110 = vpop.f32.mrf.mxu0
  %v1111 = vadd.f32 0.0, %v1110
  %1112 = vmatmul.f32.gmra.mxu0 %v466
  %v1113 = vpop.f32.mrf.mxu0
  %v1114 = vadd.f32 0.0, %v1113
  %1115 = vmatmul.f32.gmra.mxu0 %v632
  %v1116 = vpop.f32.mrf.mxu0
  %v1117 = vadd.f32 0.0, %v1116
  %1118 = vmatmul.f32.gmra.mxu0 %v809
  %v1119 = vpop.f32.mrf.mxu0
  %v1120 = vadd.f32 0.0, %v1119
  %1121 = vmatmul.f32.gmra.mxu0 %v986
  %v1122 = vpop.f32.mrf.mxu0
  %v1123 = vadd.f32 0.0, %v1122
  %1124 = vmatmul.f32.gmra.mxu0 %v478
  %v1125 = vpop.f32.mrf.mxu0
  %v1126 = vadd.f32 0.0, %v1125
  %1127 = vmatmul.f32.gmra.mxu0 %v716
  %v1128 = vpop.f32.mrf.mxu0
  %v1129 = vadd.f32 0.0, %v1128
  %1130 = vmatmul.f32.gmra.mxu0 %v893
  %v1131 = vpop.f32.mrf.mxu0
  %v1132 = vadd.f32 0.0, %v1131
  %1133 = vmatmul.f32.gmra.mxu0 %v1070
  %v1134 = vpop.f32.mrf.mxu0
  %v1135 = vadd.f32 0.0, %v1134
  %1136 = vdwg.mxu0
  %v1137 = vadd.f32 %v1053, %v1090
  %v1138 = vadd.f32 %v1054, %v1093
  %v1139 = vadd.f32 %v1055, %v1096
  %v1140 = vadd.f32 %v1056, %v1099
  %v1141 = vadd.f32 %v1057, %v1102
  %v1142 = vadd.f32 %v1058, %v1105
  %v1143 = vadd.f32 %v1059, %v1108
  %v1144 = vadd.f32 %v1060, %v1111
  %v1145 = vadd.f32 %v1061, %v1114
  %v1146 = vadd.f32 %v1062, %v1117
  %v1147 = vadd.f32 %v1063, %v1120
  %v1148 = vadd.f32 %v1064, %v1123
  %v1149 = vadd.f32 %v1065, %v1126
  %v1150 = vadd.f32 %v1066, %v1129
  %v1151 = vadd.f32 %v1067, %v1132
  %v1152 = vadd.f32 %v1068, %v1135
  %v1153 = vperm.slane %v30, 3
  %v1154 = vadd.f32 %v1137, %v1153
  %v1155 = vadd.f32 %v1138, %v1153
  %v1156 = vadd.f32 %v1139, %v1153
  %v1157 = vadd.f32 %v1140, %v1153
  %v1158 = vadd.f32 %v1141, %v1153
  %v1159 = vadd.f32 %v1142, %v1153
  %v1160 = vadd.f32 %v1143, %v1153
  %v1161 = vadd.f32 %v1144, %v1153
  %v1162 = vadd.f32 %v1145, %v1153
  %v1163 = vadd.f32 %v1146, %v1153
  %v1164 = vadd.f32 %v1147, %v1153
  %v1165 = vadd.f32 %v1148, %v1153
  %v1166 = vadd.f32 %v1149, %v1153
  %v1167 = vadd.f32 %v1150, %v1153
  %v1168 = vadd.f32 %v1151, %v1153
  %v1169 = vadd.f32 %v1152, %v1153
  %v1170 = vmax.f32 %v1154, 0.0
  %v1171 = vmax.f32 %v1155, 0.0
  %v1172 = vmax.f32 %v1156, 0.0
  %v1173 = vmax.f32 %v1157, 0.0
  %v1174 = vmax.f32 %v1158, 0.0
  %v1175 = vmax.f32 %v1159, 0.0
  %v1176 = vmax.f32 %v1160, 0.0
  %v1177 = vmax.f32 %v1161, 0.0
  %v1178 = vmax.f32 %v1162, 0.0
  %v1179 = vmax.f32 %v1163, 0.0
  %v1180 = vmax.f32 %v1164, 0.0
  %v1181 = vmax.f32 %v1165, 0.0
  %v1182 = vmax.f32 %v1166, 0.0
  %v1183 = vmax.f32 %v1167, 0.0
  %v1184 = vmax.f32 %v1168, 0.0
  %v1185 = vmax.f32 %v1169, 0.0
  %v1186 = vperm.slane %v30, 4
  %v1187 = vmul.f32 %v1170, %v1186
  %v1188 = vmul.f32 %v1171, %v1186
  %v1189 = vmul.f32 %v1172, %v1186
  %v1190 = vmul.f32 %v1173, %v1186
  %v1191 = vmul.f32 %v1174, %v1186
  %v1192 = vmul.f32 %v1175, %v1186
  %v1193 = vmul.f32 %v1176, %v1186
  %v1194 = vmul.f32 %v1177, %v1186
  %v1195 = vmul.f32 %v1178, %v1186
  %v1196 = vmul.f32 %v1179, %v1186
  %v1197 = vmul.f32 %v1180, %v1186
  %v1198 = vmul.f32 %v1181, %v1186
  %v1199 = vmul.f32 %v1182, %v1186
  %v1200 = vmul.f32 %v1183, %v1186
  %v1201 = vmul.f32 %v1184, %v1186
  %v1202 = vmul.f32 %v1185, %v1186
  %v1203 = vperm.slane %v30, 5
  %v1204 = vadd.f32 %v1187, %v1203
  %v1205 = vadd.f32 %v1188, %v1203
  %v1206 = vadd.f32 %v1189, %v1203
  %v1207 = vadd.f32 %v1190, %v1203
  %v1208 = vadd.f32 %v1191, %v1203
  %v1209 = vadd.f32 %v1192, %v1203
  %v1210 = vadd.f32 %v1193, %v1203
  %v1211 = vadd.f32 %v1194, %v1203
  %v1212 = vadd.f32 %v1195, %v1203
  %v1213 = vadd.f32 %v1196, %v1203
  %v1214 = vadd.f32 %v1197, %v1203
  %v1215 = vadd.f32 %v1198, %v1203
  %v1216 = vadd.f32 %v1199, %v1203
  %v1217 = vadd.f32 %v1200, %v1203
  %v1218 = vadd.f32 %v1201, %v1203
  %v1219 = vadd.f32 %v1202, %v1203
  %v1220 = vpack.c.bf16 %v1204, %v1204
  %v1221 = vpack.c.bf16 %v1205, %v1205
  %v1222 = vpack.c.bf16 %v1206, %v1206
  %v1223 = vpack.c.bf16 %v1207, %v1207
  %v1224 = vpack.c.bf16 %v1208, %v1208
  %v1225 = vpack.c.bf16 %v1209, %v1209
  %v1226 = vpack.c.bf16 %v1210, %v1210
  %v1227 = vpack.c.bf16 %v1211, %v1211
  %v1228 = vpack.c.bf16 %v1212, %v1212
  %v1229 = vpack.c.bf16 %v1213, %v1213
  %v1230 = vpack.c.bf16 %v1214, %v1214
  %v1231 = vpack.c.bf16 %v1215, %v1215
  %v1232 = vpack.c.bf16 %v1216, %v1216
  %v1233 = vpack.c.bf16 %v1217, %v1217
  %v1234 = vpack.c.bf16 %v1218, %v1218
  %v1235 = vpack.c.bf16 %v1219, %v1219
  %v1236 = vld [vmem:[%s3] sm:$0xff]
  %v1237 = vld [vmem:[%s3 + $0x8] sm:$0xff]
  %v1238 = vld [vmem:[%s3 + $0x10] sm:$0xff]
  %v1239 = vld [vmem:[%s3 + $0x18] sm:$0xff]
  %v1240 = vld [vmem:[%s3 + $0x20] sm:$0xff]
  %v1241 = vld [vmem:[%s3 + $0x28] sm:$0xff]
  %v1242 = vld [vmem:[%s3 + $0x30] sm:$0xff]
  %v1243 = vld [vmem:[%s3 + $0x38] sm:$0xff]
  %v1244 = vld [vmem:[%s3 + $0x40] sm:$0xff]
  %v1245 = vld [vmem:[%s3 + $0x48] sm:$0xff]
  %v1246 = vld [vmem:[%s3 + $0x50] sm:$0xff]
  %v1247 = vld [vmem:[%s3 + $0x58] sm:$0xff]
  %v1248 = vld [vmem:[%s3 + $0x60] sm:$0xff]
  %v1249 = vld [vmem:[%s3 + $0x68] sm:$0xff]
  %v1250 = vld [vmem:[%s3 + $0x70] sm:$0xff]
  %v1251 = vld [vmem:[%s3 + $0x78] sm:$0xff]
  %v1256 = vunpack.c.l.b16 %v1224
  %v1257 = vunpack.c.l.b16 %v1225
  %v1258 = vunpack.c.l.b16 %v1226
  %v1259 = vunpack.c.l.b16 %v1227
  %v1260 = vpack.c.b16 %v1257, %v1256
  %v1261 = vpack.c.b16 %v1259, %v1258
  %v1266 = vunpack.c.l.b16 %v1240
  %v1267 = vunpack.c.h.b16 %v1240
  %v1268 = vunpack.c.l.b16 %v1241
  %v1269 = vunpack.c.h.b16 %v1241
  %v1270 = vunpack.c.l.b16 %v1242
  %v1271 = vunpack.c.h.b16 %v1242
  %v1272 = vunpack.c.l.b16 %v1243
  %v1273 = vunpack.c.h.b16 %v1243
  %v1274 = vpack.c.b16 %v1270, %v1266
  %v1275 = vpack.c.b16 %v1271, %v1267
  %v1276 = vpack.c.b16 %v1272, %v1268
  %v1277 = vpack.c.b16 %v1273, %v1269
  %vm1282 = vcmask 130048
  %v1284 = vsel %vm1282, %v1260, 0
  %v1287 = vsel %vm1282, %v1261, 0
  %1289 = vmatpush.bf16.msra.mxu0 0
  %1290 = vmatpush.bf16.msra.mxu0 0
  %1291 = vmatpush.bf16.msra.mxu0 0
  %1292 = vmatpush.bf16.msra.mxu0 0
  %1293 = vmatpush.bf16.msra.mxu0 0
  %1294 = vmatpush.bf16.msra.mxu0 0
  %1295 = vmatpush.bf16.msra.mxu0 0
  %1296 = vmatpush.bf16.msra.mxu0 %v1274
  %1297 = vmatmul.bf16.gmra.mxu0 %v1284
  %v1298 = vpop.f32.mrf.mxu0
  %v1299 = vadd.f32 0.0, %v1298
  %v1300 = vpop.f32.mrf.mxu0
  %v1301 = vadd.f32 0.0, %v1300
  %1302 = vmatmul.bf16.gmra.mxu0 %v1287
  %v1303 = vpop.f32.mrf.mxu0
  %v1304 = vadd.f32 0.0, %v1303
  %v1305 = vpop.f32.mrf.mxu0
  %v1306 = vadd.f32 0.0, %v1305
  %1307 = vdwg.mxu0
  %1308 = vmatpush.bf16.msra.mxu0 0
  %1309 = vmatpush.bf16.msra.mxu0 0
  %1310 = vmatpush.bf16.msra.mxu0 0
  %1311 = vmatpush.bf16.msra.mxu0 0
  %1312 = vmatpush.bf16.msra.mxu0 0
  %1313 = vmatpush.bf16.msra.mxu0 0
  %1314 = vmatpush.bf16.msra.mxu0 0
  %1315 = vmatpush.bf16.msra.mxu0 %v1275
  %1316 = vmatmul.bf16.gmra.mxu0 %v1284
  %v1317 = vpop.f32.mrf.mxu0
  %v1318 = vadd.f32 0.0, %v1317
  %v1319 = vpop.f32.mrf.mxu0
  %v1320 = vadd.f32 0.0, %v1319
  %1321 = vmatmul.bf16.gmra.mxu0 %v1287
  %v1322 = vpop.f32.mrf.mxu0
  %v1323 = vadd.f32 0.0, %v1322
  %v1324 = vpop.f32.mrf.mxu0
  %v1325 = vadd.f32 0.0, %v1324
  %1326 = vdwg.mxu0
  %1327 = vmatpush.bf16.msra.mxu0 0
  %1328 = vmatpush.bf16.msra.mxu0 0
  %1329 = vmatpush.bf16.msra.mxu0 0
  %1330 = vmatpush.bf16.msra.mxu0 0
  %1331 = vmatpush.bf16.msra.mxu0 0
  %1332 = vmatpush.bf16.msra.mxu0 0
  %1333 = vmatpush.bf16.msra.mxu0 0
  %1334 = vmatpush.bf16.msra.mxu0 %v1276
  %1335 = vmatmul.bf16.gmra.mxu0 %v1284
  %v1336 = vpop.f32.mrf.mxu0
  %v1337 = vadd.f32 0.0, %v1336
  %v1338 = vpop.f32.mrf.mxu0
  %v1339 = vadd.f32 0.0, %v1338
  %1340 = vmatmul.bf16.gmra.mxu0 %v1287
  %v1341 = vpop.f32.mrf.mxu0
  %v1342 = vadd.f32 0.0, %v1341
  %v1343 = vpop.f32.mrf.mxu0
  %v1344 = vadd.f32 0.0, %v1343
  %1345 = vdwg.mxu0
  %1346 = vmatpush.bf16.msra.mxu0 0
  %1347 = vmatpush.bf16.msra.mxu0 0
  %1348 = vmatpush.bf16.msra.mxu0 0
  %1349 = vmatpush.bf16.msra.mxu0 0
  %1350 = vmatpush.bf16.msra.mxu0 0
  %1351 = vmatpush.bf16.msra.mxu0 0
  %1352 = vmatpush.bf16.msra.mxu0 0
  %1353 = vmatpush.bf16.msra.mxu0 %v1277
  %1354 = vmatmul.bf16.gmra.mxu0 %v1284
  %v1355 = vpop.f32.mrf.mxu0
  %v1356 = vadd.f32 0.0, %v1355
  %v1357 = vpop.f32.mrf.mxu0
  %v1358 = vadd.f32 0.0, %v1357
  %1359 = vmatmul.bf16.gmra.mxu0 %v1287
  %v1360 = vpop.f32.mrf.mxu0
  %v1361 = vadd.f32 0.0, %v1360
  %v1362 = vpop.f32.mrf.mxu0
  %v1363 = vadd.f32 0.0, %v1362
  %1364 = vdwg.mxu0
  %v1369 = vunpack.c.l.b16 %v1220
  %v1370 = vunpack.c.l.b16 %v1221
  %v1371 = vunpack.c.l.b16 %v1222
  %v1372 = vunpack.c.l.b16 %v1223
  %v1373 = vpack.c.b16 %v1370, %v1369
  %v1374 = vpack.c.b16 %v1372, %v1371
  %v1379 = vunpack.c.l.b16 %v1236
  %v1380 = vunpack.c.h.b16 %v1236
  %v1381 = vunpack.c.l.b16 %v1237
  %v1382 = vunpack.c.h.b16 %v1237
  %v1383 = vunpack.c.l.b16 %v1238
  %v1384 = vunpack.c.h.b16 %v1238
  %v1385 = vunpack.c.l.b16 %v1239
  %v1386 = vunpack.c.h.b16 %v1239
  %v1387 = vpack.c.b16 %v1383, %v1379
  %v1388 = vpack.c.b16 %v1384, %v1380
  %v1389 = vpack.c.b16 %v1385, %v1381
  %v1390 = vpack.c.b16 %v1386, %v1382
  %v1396 = vsel %vm1282, %v1373, 0
  %v1399 = vsel %vm1282, %v1374, 0
  %1401 = vmatpush.bf16.msra.mxu0 0
  %1402 = vmatpush.bf16.msra.mxu0 0
  %1403 = vmatpush.bf16.msra.mxu0 0
  %1404 = vmatpush.bf16.msra.mxu0 0
  %1405 = vmatpush.bf16.msra.mxu0 0
  %1406 = vmatpush.bf16.msra.mxu0 0
  %1407 = vmatpush.bf16.msra.mxu0 0
  %1408 = vmatpush.bf16.msra.mxu0 %v1387
  %1409 = vmatmul.bf16.gmra.mxu0 %v1396
  %v1410 = vpop.f32.mrf.mxu0
  %v1411 = vadd.f32 %v1299, %v1410
  %v1412 = vpop.f32.mrf.mxu0
  %v1413 = vadd.f32 %v1301, %v1412
  %1414 = vmatmul.bf16.gmra.mxu0 %v1399
  %v1415 = vpop.f32.mrf.mxu0
  %v1416 = vadd.f32 %v1304, %v1415
  %v1417 = vpop.f32.mrf.mxu0
  %v1418 = vadd.f32 %v1306, %v1417
  %1419 = vdwg.mxu0
  %1420 = vmatpush.bf16.msra.mxu0 0
  %1421 = vmatpush.bf16.msra.mxu0 0
  %1422 = vmatpush.bf16.msra.mxu0 0
  %1423 = vmatpush.bf16.msra.mxu0 0
  %1424 = vmatpush.bf16.msra.mxu0 0
  %1425 = vmatpush.bf16.msra.mxu0 0
  %1426 = vmatpush.bf16.msra.mxu0 0
  %1427 = vmatpush.bf16.msra.mxu0 %v1388
  %1428 = vmatmul.bf16.gmra.mxu0 %v1396
  %v1429 = vpop.f32.mrf.mxu0
  %v1430 = vadd.f32 %v1318, %v1429
  %v1431 = vpop.f32.mrf.mxu0
  %v1432 = vadd.f32 %v1320, %v1431
  %1433 = vmatmul.bf16.gmra.mxu0 %v1399
  %v1434 = vpop.f32.mrf.mxu0
  %v1435 = vadd.f32 %v1323, %v1434
  %v1436 = vpop.f32.mrf.mxu0
  %v1437 = vadd.f32 %v1325, %v1436
  %1438 = vdwg.mxu0
  %1439 = vmatpush.bf16.msra.mxu0 0
  %1440 = vmatpush.bf16.msra.mxu0 0
  %1441 = vmatpush.bf16.msra.mxu0 0
  %1442 = vmatpush.bf16.msra.mxu0 0
  %1443 = vmatpush.bf16.msra.mxu0 0
  %1444 = vmatpush.bf16.msra.mxu0 0
  %1445 = vmatpush.bf16.msra.mxu0 0
  %1446 = vmatpush.bf16.msra.mxu0 %v1389
  %1447 = vmatmul.bf16.gmra.mxu0 %v1396
  %v1448 = vpop.f32.mrf.mxu0
  %v1449 = vadd.f32 %v1337, %v1448
  %v1450 = vpop.f32.mrf.mxu0
  %v1451 = vadd.f32 %v1339, %v1450
  %1452 = vmatmul.bf16.gmra.mxu0 %v1399
  %v1453 = vpop.f32.mrf.mxu0
  %v1454 = vadd.f32 %v1342, %v1453
  %v1455 = vpop.f32.mrf.mxu0
  %v1456 = vadd.f32 %v1344, %v1455
  %1457 = vdwg.mxu0
  %1458 = vmatpush.bf16.msra.mxu0 0
  %1459 = vmatpush.bf16.msra.mxu0 0
  %1460 = vmatpush.bf16.msra.mxu0 0
  %1461 = vmatpush.bf16.msra.mxu0 0
  %1462 = vmatpush.bf16.msra.mxu0 0
  %1463 = vmatpush.bf16.msra.mxu0 0
  %1464 = vmatpush.bf16.msra.mxu0 0
  %1465 = vmatpush.bf16.msra.mxu0 %v1390
  %1466 = vmatmul.bf16.gmra.mxu0 %v1396
  %v1467 = vpop.f32.mrf.mxu0
  %v1468 = vadd.f32 %v1356, %v1467
  %v1469 = vpop.f32.mrf.mxu0
  %v1470 = vadd.f32 %v1358, %v1469
  %1471 = vmatmul.bf16.gmra.mxu0 %v1399
  %v1472 = vpop.f32.mrf.mxu0
  %v1473 = vadd.f32 %v1361, %v1472
  %v1474 = vpop.f32.mrf.mxu0
  %v1475 = vadd.f32 %v1363, %v1474
  %1476 = vdwg.mxu0
  %v1481 = vunpack.c.l.b16 %v1228
  %v1482 = vunpack.c.l.b16 %v1229
  %v1483 = vunpack.c.l.b16 %v1230
  %v1484 = vunpack.c.l.b16 %v1231
  %v1485 = vpack.c.b16 %v1482, %v1481
  %v1486 = vpack.c.b16 %v1484, %v1483
  %v1491 = vunpack.c.l.b16 %v1244
  %v1492 = vunpack.c.h.b16 %v1244
  %v1493 = vunpack.c.l.b16 %v1245
  %v1494 = vunpack.c.h.b16 %v1245
  %v1495 = vunpack.c.l.b16 %v1246
  %v1496 = vunpack.c.h.b16 %v1246
  %v1497 = vunpack.c.l.b16 %v1247
  %v1498 = vunpack.c.h.b16 %v1247
  %v1499 = vpack.c.b16 %v1495, %v1491
  %v1500 = vpack.c.b16 %v1496, %v1492
  %v1501 = vpack.c.b16 %v1497, %v1493
  %v1502 = vpack.c.b16 %v1498, %v1494
  %v1508 = vsel %vm1282, %v1485, 0
  %v1511 = vsel %vm1282, %v1486, 0
  %1513 = vmatpush.bf16.msra.mxu0 0
  %1514 = vmatpush.bf16.msra.mxu0 0
  %1515 = vmatpush.bf16.msra.mxu0 0
  %1516 = vmatpush.bf16.msra.mxu0 0
  %1517 = vmatpush.bf16.msra.mxu0 0
  %1518 = vmatpush.bf16.msra.mxu0 0
  %1519 = vmatpush.bf16.msra.mxu0 0
  %1520 = vmatpush.bf16.msra.mxu0 %v1499
  %1521 = vmatmul.bf16.gmra.mxu0 %v1508
  %v1522 = vpop.f32.mrf.mxu0
  %v1523 = vadd.f32 0.0, %v1522
  %v1524 = vpop.f32.mrf.mxu0
  %v1525 = vadd.f32 0.0, %v1524
  %1526 = vmatmul.bf16.gmra.mxu0 %v1511
  %v1527 = vpop.f32.mrf.mxu0
  %v1528 = vadd.f32 0.0, %v1527
  %v1529 = vpop.f32.mrf.mxu0
  %v1530 = vadd.f32 0.0, %v1529
  %1531 = vdwg.mxu0
  %1532 = vmatpush.bf16.msra.mxu0 0
  %1533 = vmatpush.bf16.msra.mxu0 0
  %1534 = vmatpush.bf16.msra.mxu0 0
  %1535 = vmatpush.bf16.msra.mxu0 0
  %1536 = vmatpush.bf16.msra.mxu0 0
  %1537 = vmatpush.bf16.msra.mxu0 0
  %1538 = vmatpush.bf16.msra.mxu0 0
  %1539 = vmatpush.bf16.msra.mxu0 %v1500
  %1540 = vmatmul.bf16.gmra.mxu0 %v1508
  %v1541 = vpop.f32.mrf.mxu0
  %v1542 = vadd.f32 0.0, %v1541
  %v1543 = vpop.f32.mrf.mxu0
  %v1544 = vadd.f32 0.0, %v1543
  %1545 = vmatmul.bf16.gmra.mxu0 %v1511
  %v1546 = vpop.f32.mrf.mxu0
  %v1547 = vadd.f32 0.0, %v1546
  %v1548 = vpop.f32.mrf.mxu0
  %v1549 = vadd.f32 0.0, %v1548
  %1550 = vdwg.mxu0
  %1551 = vmatpush.bf16.msra.mxu0 0
  %1552 = vmatpush.bf16.msra.mxu0 0
  %1553 = vmatpush.bf16.msra.mxu0 0
  %1554 = vmatpush.bf16.msra.mxu0 0
  %1555 = vmatpush.bf16.msra.mxu0 0
  %1556 = vmatpush.bf16.msra.mxu0 0
  %1557 = vmatpush.bf16.msra.mxu0 0
  %1558 = vmatpush.bf16.msra.mxu0 %v1501
  %1559 = vmatmul.bf16.gmra.mxu0 %v1508
  %v1560 = vpop.f32.mrf.mxu0
  %v1561 = vadd.f32 0.0, %v1560
  %v1562 = vpop.f32.mrf.mxu0
  %v1563 = vadd.f32 0.0, %v1562
  %1564 = vmatmul.bf16.gmra.mxu0 %v1511
  %v1565 = vpop.f32.mrf.mxu0
  %v1566 = vadd.f32 0.0, %v1565
  %v1567 = vpop.f32.mrf.mxu0
  %v1568 = vadd.f32 0.0, %v1567
  %1569 = vdwg.mxu0
  %1570 = vmatpush.bf16.msra.mxu0 0
  %1571 = vmatpush.bf16.msra.mxu0 0
  %1572 = vmatpush.bf16.msra.mxu0 0
  %1573 = vmatpush.bf16.msra.mxu0 0
  %1574 = vmatpush.bf16.msra.mxu0 0
  %1575 = vmatpush.bf16.msra.mxu0 0
  %1576 = vmatpush.bf16.msra.mxu0 0
  %1577 = vmatpush.bf16.msra.mxu0 %v1502
  %1578 = vmatmul.bf16.gmra.mxu0 %v1508
  %v1579 = vpop.f32.mrf.mxu0
  %v1580 = vadd.f32 0.0, %v1579
  %v1581 = vpop.f32.mrf.mxu0
  %v1582 = vadd.f32 0.0, %v1581
  %1583 = vmatmul.bf16.gmra.mxu0 %v1511
  %v1584 = vpop.f32.mrf.mxu0
  %v1585 = vadd.f32 0.0, %v1584
  %v1586 = vpop.f32.mrf.mxu0
  %v1587 = vadd.f32 0.0, %v1586
  %1588 = vdwg.mxu0
  %v1589 = vadd.f32 %v1411, %v1523
  %v1590 = vadd.f32 %v1430, %v1542
  %v1591 = vadd.f32 %v1449, %v1561
  %v1592 = vadd.f32 %v1468, %v1580
  %v1593 = vadd.f32 %v1413, %v1525
  %v1594 = vadd.f32 %v1432, %v1544
  %v1595 = vadd.f32 %v1451, %v1563
  %v1596 = vadd.f32 %v1470, %v1582
  %v1597 = vadd.f32 %v1416, %v1528
  %v1598 = vadd.f32 %v1435, %v1547
  %v1599 = vadd.f32 %v1454, %v1566
  %v1600 = vadd.f32 %v1473, %v1585
  %v1601 = vadd.f32 %v1418, %v1530
  %v1602 = vadd.f32 %v1437, %v1549
  %v1603 = vadd.f32 %v1456, %v1568
  %v1604 = vadd.f32 %v1475, %v1587
  %v1609 = vunpack.c.l.b16 %v1232
  %v1610 = vunpack.c.l.b16 %v1233
  %v1611 = vunpack.c.l.b16 %v1234
  %v1612 = vunpack.c.l.b16 %v1235
  %v1613 = vpack.c.b16 %v1610, %v1609
  %v1614 = vpack.c.b16 %v1612, %v1611
  %v1619 = vunpack.c.l.b16 %v1248
  %v1620 = vunpack.c.h.b16 %v1248
  %v1621 = vunpack.c.l.b16 %v1249
  %v1622 = vunpack.c.h.b16 %v1249
  %v1623 = vunpack.c.l.b16 %v1250
  %v1624 = vunpack.c.h.b16 %v1250
  %v1625 = vunpack.c.l.b16 %v1251
  %v1626 = vunpack.c.h.b16 %v1251
  %v1627 = vpack.c.b16 %v1623, %v1619
  %v1628 = vpack.c.b16 %v1624, %v1620
  %v1629 = vpack.c.b16 %v1625, %v1621
  %v1630 = vpack.c.b16 %v1626, %v1622
  %v1636 = vsel %vm1282, %v1613, 0
  %v1639 = vsel %vm1282, %v1614, 0
  %1641 = vmatpush.bf16.msra.mxu0 0
  %1642 = vmatpush.bf16.msra.mxu0 0
  %1643 = vmatpush.bf16.msra.mxu0 0
  %1644 = vmatpush.bf16.msra.mxu0 0
  %1645 = vmatpush.bf16.msra.mxu0 0
  %1646 = vmatpush.bf16.msra.mxu0 0
  %1647 = vmatpush.bf16.msra.mxu0 0
  %1648 = vmatpush.bf16.msra.mxu0 %v1627
  %1649 = vmatmul.bf16.gmra.mxu0 %v1636
  %v1650 = vpop.f32.mrf.mxu0
  %v1651 = vadd.f32 0.0, %v1650
  %v1652 = vpop.f32.mrf.mxu0
  %v1653 = vadd.f32 0.0, %v1652
  %1654 = vmatmul.bf16.gmra.mxu0 %v1639
  %v1655 = vpop.f32.mrf.mxu0
  %v1656 = vadd.f32 0.0, %v1655
  %v1657 = vpop.f32.mrf.mxu0
  %v1658 = vadd.f32 0.0, %v1657
  %1659 = vdwg.mxu0
  %1660 = vmatpush.bf16.msra.mxu0 0
  %1661 = vmatpush.bf16.msra.mxu0 0
  %1662 = vmatpush.bf16.msra.mxu0 0
  %1663 = vmatpush.bf16.msra.mxu0 0
  %1664 = vmatpush.bf16.msra.mxu0 0
  %1665 = vmatpush.bf16.msra.mxu0 0
  %1666 = vmatpush.bf16.msra.mxu0 0
  %1667 = vmatpush.bf16.msra.mxu0 %v1628
  %1668 = vmatmul.bf16.gmra.mxu0 %v1636
  %v1669 = vpop.f32.mrf.mxu0
  %v1670 = vadd.f32 0.0, %v1669
  %v1671 = vpop.f32.mrf.mxu0
  %v1672 = vadd.f32 0.0, %v1671
  %1673 = vmatmul.bf16.gmra.mxu0 %v1639
  %v1674 = vpop.f32.mrf.mxu0
  %v1675 = vadd.f32 0.0, %v1674
  %v1676 = vpop.f32.mrf.mxu0
  %v1677 = vadd.f32 0.0, %v1676
  %1678 = vdwg.mxu0
  %1679 = vmatpush.bf16.msra.mxu0 0
  %1680 = vmatpush.bf16.msra.mxu0 0
  %1681 = vmatpush.bf16.msra.mxu0 0
  %1682 = vmatpush.bf16.msra.mxu0 0
  %1683 = vmatpush.bf16.msra.mxu0 0
  %1684 = vmatpush.bf16.msra.mxu0 0
  %1685 = vmatpush.bf16.msra.mxu0 0
  %1686 = vmatpush.bf16.msra.mxu0 %v1629
  %1687 = vmatmul.bf16.gmra.mxu0 %v1636
  %v1688 = vpop.f32.mrf.mxu0
  %v1689 = vadd.f32 0.0, %v1688
  %v1690 = vpop.f32.mrf.mxu0
  %v1691 = vadd.f32 0.0, %v1690
  %1692 = vmatmul.bf16.gmra.mxu0 %v1639
  %v1693 = vpop.f32.mrf.mxu0
  %v1694 = vadd.f32 0.0, %v1693
  %v1695 = vpop.f32.mrf.mxu0
  %v1696 = vadd.f32 0.0, %v1695
  %1697 = vdwg.mxu0
  %1698 = vmatpush.bf16.msra.mxu0 0
  %1699 = vmatpush.bf16.msra.mxu0 0
  %1700 = vmatpush.bf16.msra.mxu0 0
  %1701 = vmatpush.bf16.msra.mxu0 0
  %1702 = vmatpush.bf16.msra.mxu0 0
  %1703 = vmatpush.bf16.msra.mxu0 0
  %1704 = vmatpush.bf16.msra.mxu0 0
  %1705 = vmatpush.bf16.msra.mxu0 %v1630
  %1706 = vmatmul.bf16.gmra.mxu0 %v1636
  %v1707 = vpop.f32.mrf.mxu0
  %v1708 = vadd.f32 0.0, %v1707
  %v1709 = vpop.f32.mrf.mxu0
  %v1710 = vadd.f32 0.0, %v1709
  %1711 = vmatmul.bf16.gmra.mxu0 %v1639
  %v1712 = vpop.f32.mrf.mxu0
  %v1713 = vadd.f32 0.0, %v1712
  %v1714 = vpop.f32.mrf.mxu0
  %v1715 = vadd.f32 0.0, %v1714
  %1716 = vdwg.mxu0
  %v1717 = vadd.f32 %v1589, %v1651
  %v1718 = vadd.f32 %v1590, %v1670
  %v1719 = vadd.f32 %v1591, %v1689
  %v1720 = vadd.f32 %v1592, %v1708
  %v1721 = vadd.f32 %v1593, %v1653
  %v1722 = vadd.f32 %v1594, %v1672
  %v1723 = vadd.f32 %v1595, %v1691
  %v1724 = vadd.f32 %v1596, %v1710
  %v1725 = vadd.f32 %v1597, %v1656
  %v1726 = vadd.f32 %v1598, %v1675
  %v1727 = vadd.f32 %v1599, %v1694
  %v1728 = vadd.f32 %v1600, %v1713
  %v1729 = vadd.f32 %v1601, %v1658
  %v1730 = vadd.f32 %v1602, %v1677
  %v1731 = vadd.f32 %v1603, %v1696
  %v1732 = vadd.f32 %v1604, %v1715
  %v1733 = vperm.slane %v30, 6
  %v1734 = vperm.slane %v31, 6
  %v1735 = vperm.slane %v32, 6
  %v1736 = vperm.slane %v33, 6
  %v1737 = vadd.f32 %v1717, %v1733
  %v1738 = vadd.f32 %v1718, %v1734
  %v1739 = vadd.f32 %v1719, %v1735
  %v1740 = vadd.f32 %v1720, %v1736
  %v1741 = vadd.f32 %v1721, %v1733
  %v1742 = vadd.f32 %v1722, %v1734
  %v1743 = vadd.f32 %v1723, %v1735
  %v1744 = vadd.f32 %v1724, %v1736
  %v1745 = vadd.f32 %v1725, %v1733
  %v1746 = vadd.f32 %v1726, %v1734
  %v1747 = vadd.f32 %v1727, %v1735
  %v1748 = vadd.f32 %v1728, %v1736
  %v1749 = vadd.f32 %v1729, %v1733
  %v1750 = vadd.f32 %v1730, %v1734
  %v1751 = vadd.f32 %v1731, %v1735
  %v1752 = vadd.f32 %v1732, %v1736
  %v1753 = vld [vmem:[%s4] sm:$0xff]
  %v1754 = vld [vmem:[%s4 + $0x8] sm:$0xff]
  %v1755 = vld [vmem:[%s4 + $0x10] sm:$0xff]
  %v1756 = vld [vmem:[%s4 + $0x18] sm:$0xff]
  %v1757 = vld [vmem:[%s4 + $0x20] sm:$0xff]
  %v1758 = vld [vmem:[%s4 + $0x28] sm:$0xff]
  %v1759 = vld [vmem:[%s4 + $0x30] sm:$0xff]
  %v1760 = vld [vmem:[%s4 + $0x38] sm:$0xff]
  %v1761 = vld [vmem:[%s4 + $0x40] sm:$0xff]
  %v1762 = vld [vmem:[%s4 + $0x48] sm:$0xff]
  %v1763 = vld [vmem:[%s4 + $0x50] sm:$0xff]
  %v1764 = vld [vmem:[%s4 + $0x58] sm:$0xff]
  %v1765 = vld [vmem:[%s4 + $0x60] sm:$0xff]
  %v1766 = vld [vmem:[%s4 + $0x68] sm:$0xff]
  %v1767 = vld [vmem:[%s4 + $0x70] sm:$0xff]
  %v1768 = vld [vmem:[%s4 + $0x78] sm:$0xff]
  %v1769 = vld [vmem:[%s4 + $0x80] sm:$0xff]
  %v1770 = vld [vmem:[%s4 + $0x88] sm:$0xff]
  %v1771 = vld [vmem:[%s4 + $0x90] sm:$0xff]
  %v1772 = vld [vmem:[%s4 + $0x98] sm:$0xff]
  %v1773 = vld [vmem:[%s4 + $0xa0] sm:$0xff]
  %v1774 = vld [vmem:[%s4 + $0xa8] sm:$0xff]
  %v1775 = vld [vmem:[%s4 + $0xb0] sm:$0xff]
  %v1776 = vld [vmem:[%s4 + $0xb8] sm:$0xff]
  %v1777 = vld [vmem:[%s4 + $0xc0] sm:$0xff]
  %v1778 = vld [vmem:[%s4 + $0xc8] sm:$0xff]
  %v1779 = vld [vmem:[%s4 + $0xd0] sm:$0xff]
  %v1780 = vld [vmem:[%s4 + $0xd8] sm:$0xff]
  %v1781 = vld [vmem:[%s4 + $0xe0] sm:$0xff]
  %v1782 = vld [vmem:[%s4 + $0xe8] sm:$0xff]
  %v1783 = vld [vmem:[%s4 + $0xf0] sm:$0xff]
  %v1784 = vld [vmem:[%s4 + $0xf8] sm:$0xff]
  %v1817 = vunpack.c.l.b16 %v1753
  %v1818 = vunpack.c.h.b16 %v1753
  %v1819 = vunpack.c.l.b16 %v1754
  %v1820 = vunpack.c.h.b16 %v1754
  %v1821 = vunpack.c.l.b16 %v1755
  %v1822 = vunpack.c.h.b16 %v1755
  %v1823 = vunpack.c.l.b16 %v1756
  %v1824 = vunpack.c.h.b16 %v1756
  %v1825 = vunpack.c.l.b16 %v1757
  %v1826 = vunpack.c.h.b16 %v1757
  %v1827 = vunpack.c.l.b16 %v1758
  %v1828 = vunpack.c.h.b16 %v1758
  %v1829 = vunpack.c.l.b16 %v1759
  %v1830 = vunpack.c.h.b16 %v1759
  %v1831 = vunpack.c.l.b16 %v1760
  %v1832 = vunpack.c.h.b16 %v1760
  %v1833 = vunpack.c.l.b16 %v1761
  %v1834 = vunpack.c.h.b16 %v1761
  %v1835 = vunpack.c.l.b16 %v1762
  %v1836 = vunpack.c.h.b16 %v1762
  %v1837 = vunpack.c.l.b16 %v1763
  %v1838 = vunpack.c.h.b16 %v1763
  %v1839 = vunpack.c.l.b16 %v1764
  %v1840 = vunpack.c.h.b16 %v1764
  %v1841 = vunpack.c.l.b16 %v1765
  %v1842 = vunpack.c.h.b16 %v1765
  %v1843 = vunpack.c.l.b16 %v1766
  %v1844 = vunpack.c.h.b16 %v1766
  %v1845 = vunpack.c.l.b16 %v1767
  %v1846 = vunpack.c.h.b16 %v1767
  %v1847 = vunpack.c.l.b16 %v1768
  %v1848 = vunpack.c.h.b16 %v1768
  %v1849 = vunpack.c.l.b16 %v1769
  %v1850 = vunpack.c.h.b16 %v1769
  %v1851 = vunpack.c.l.b16 %v1770
  %v1852 = vunpack.c.h.b16 %v1770
  %v1853 = vunpack.c.l.b16 %v1771
  %v1854 = vunpack.c.h.b16 %v1771
  %v1855 = vunpack.c.l.b16 %v1772
  %v1856 = vunpack.c.h.b16 %v1772
  %v1857 = vunpack.c.l.b16 %v1773
  %v1858 = vunpack.c.h.b16 %v1773
  %v1859 = vunpack.c.l.b16 %v1774
  %v1860 = vunpack.c.h.b16 %v1774
  %v1861 = vunpack.c.l.b16 %v1775
  %v1862 = vunpack.c.h.b16 %v1775
  %v1863 = vunpack.c.l.b16 %v1776
  %v1864 = vunpack.c.h.b16 %v1776
  %v1865 = vunpack.c.l.b16 %v1777
  %v1866 = vunpack.c.h.b16 %v1777
  %v1867 = vunpack.c.l.b16 %v1778
  %v1868 = vunpack.c.h.b16 %v1778
  %v1869 = vunpack.c.l.b16 %v1779
  %v1870 = vunpack.c.h.b16 %v1779
  %v1871 = vunpack.c.l.b16 %v1780
  %v1872 = vunpack.c.h.b16 %v1780
  %v1873 = vunpack.c.l.b16 %v1781
  %v1874 = vunpack.c.h.b16 %v1781
  %v1875 = vunpack.c.l.b16 %v1782
  %v1876 = vunpack.c.h.b16 %v1782
  %v1877 = vunpack.c.l.b16 %v1783
  %v1878 = vunpack.c.h.b16 %v1783
  %v1879 = vunpack.c.l.b16 %v1784
  %v1880 = vunpack.c.h.b16 %v1784
  %v1881 = vpack.c.b16 %v1821, %v1817
  %v1882 = vpack.c.b16 %v1822, %v1818
  %v1883 = vpack.c.b16 %v1823, %v1819
  %v1884 = vpack.c.b16 %v1824, %v1820
  %v1885 = vpack.c.b16 %v1829, %v1825
  %v1886 = vpack.c.b16 %v1830, %v1826
  %v1887 = vpack.c.b16 %v1831, %v1827
  %v1888 = vpack.c.b16 %v1832, %v1828
  %v1889 = vpack.c.b16 %v1837, %v1833
  %v1890 = vpack.c.b16 %v1838, %v1834
  %v1891 = vpack.c.b16 %v1839, %v1835
  %v1892 = vpack.c.b16 %v1840, %v1836
  %v1893 = vpack.c.b16 %v1845, %v1841
  %v1894 = vpack.c.b16 %v1846, %v1842
  %v1895 = vpack.c.b16 %v1847, %v1843
  %v1896 = vpack.c.b16 %v1848, %v1844
  %v1897 = vpack.c.b16 %v1853, %v1849
  %v1898 = vpack.c.b16 %v1854, %v1850
  %v1899 = vpack.c.b16 %v1855, %v1851
  %v1900 = vpack.c.b16 %v1856, %v1852
  %v1901 = vpack.c.b16 %v1861, %v1857
  %v1902 = vpack.c.b16 %v1862, %v1858
  %v1903 = vpack.c.b16 %v1863, %v1859
  %v1904 = vpack.c.b16 %v1864, %v1860
  %v1905 = vpack.c.b16 %v1869, %v1865
  %v1906 = vpack.c.b16 %v1870, %v1866
  %v1907 = vpack.c.b16 %v1871, %v1867
  %v1908 = vpack.c.b16 %v1872, %v1868
  %v1909 = vpack.c.b16 %v1877, %v1873
  %v1910 = vpack.c.b16 %v1878, %v1874
  %v1911 = vpack.c.b16 %v1879, %v1875
  %v1912 = vpack.c.b16 %v1880, %v1876
  %1945 = vmatpush.bf16.msra.mxu0 %v1909
  %1946 = vmatpush.bf16.msra.mxu0 %v1905
  %1947 = vmatpush.bf16.msra.mxu0 %v1901
  %1948 = vmatpush.bf16.msra.mxu0 %v1897
  %1949 = vmatpush.bf16.msra.mxu0 %v1893
  %1950 = vmatpush.bf16.msra.mxu0 %v1889
  %1951 = vmatpush.bf16.msra.mxu0 %v1885
  %1952 = vmatpush.bf16.msra.mxu0 %v1881
  %1953 = vmatmul.bf16.gmra.mxu0 0
  %v1954 = vpop.f32.mrf.mxu0
  %v1955 = vadd.f32 0.0, %v1954
  %v1956 = vpop.f32.mrf.mxu0
  %1957 = vdwg.mxu0
  %1958 = vmatpush.bf16.msra.mxu0 %v1910
  %1959 = vmatpush.bf16.msra.mxu0 %v1906
  %1960 = vmatpush.bf16.msra.mxu0 %v1902
  %1961 = vmatpush.bf16.msra.mxu0 %v1898
  %1962 = vmatpush.bf16.msra.mxu0 %v1894
  %1963 = vmatpush.bf16.msra.mxu0 %v1890
  %1964 = vmatpush.bf16.msra.mxu0 %v1886
  %1965 = vmatpush.bf16.msra.mxu0 %v1882
  %1966 = vmatmul.bf16.gmra.mxu0 0
  %v1967 = vpop.f32.mrf.mxu0
  %v1968 = vadd.f32 0.0, %v1967
  %v1969 = vpop.f32.mrf.mxu0
  %1970 = vdwg.mxu0
  %1971 = vmatpush.bf16.msra.mxu0 %v1911
  %1972 = vmatpush.bf16.msra.mxu0 %v1907
  %1973 = vmatpush.bf16.msra.mxu0 %v1903
  %1974 = vmatpush.bf16.msra.mxu0 %v1899
  %1975 = vmatpush.bf16.msra.mxu0 %v1895
  %1976 = vmatpush.bf16.msra.mxu0 %v1891
  %1977 = vmatpush.bf16.msra.mxu0 %v1887
  %1978 = vmatpush.bf16.msra.mxu0 %v1883
  %1979 = vmatmul.bf16.gmra.mxu0 0
  %v1980 = vpop.f32.mrf.mxu0
  %v1981 = vadd.f32 0.0, %v1980
  %v1982 = vpop.f32.mrf.mxu0
  %1983 = vdwg.mxu0
  %1984 = vmatpush.bf16.msra.mxu0 %v1912
  %1985 = vmatpush.bf16.msra.mxu0 %v1908
  %1986 = vmatpush.bf16.msra.mxu0 %v1904
  %1987 = vmatpush.bf16.msra.mxu0 %v1900
  %1988 = vmatpush.bf16.msra.mxu0 %v1896
  %1989 = vmatpush.bf16.msra.mxu0 %v1892
  %1990 = vmatpush.bf16.msra.mxu0 %v1888
  %1991 = vmatpush.bf16.msra.mxu0 %v1884
  %1992 = vmatmul.bf16.gmra.mxu0 0
  %v1993 = vpop.f32.mrf.mxu0
  %v1994 = vadd.f32 0.0, %v1993
  %v1995 = vpop.f32.mrf.mxu0
  %1996 = vdwg.mxu0
  %v1997 = vadd.f32 %v1737, %v1955
  %v1998 = vadd.f32 %v1738, %v1968
  %v1999 = vadd.f32 %v1739, %v1981
  %v2000 = vadd.f32 %v1740, %v1994
  %v2001 = vxor.u32 %v1997, 2147483648
  %v2002 = vmul.f32 %v2001, 1.442695
  %v2003 = vpow.pop %v2002
  %v2004 = vadd.f32 %v2003, 1.0
  %v2005 = vrcp.pop %v2004
  %v2006 = vmul.f32 %v2004, %v2005
  %v2007 = vsub.f32 1.0, %v2006
  %v2008 = vmul.f32 %v2005, %v2007
  %v2009 = vadd.f32 %v2005, %v2008
  %vm2010 = vweird.f32 %v2004
  %vm2011 = vweird.f32 %v2005
  %vm2012 = vmor %vm2010, %vm2011
  %v2013 = vsel %vm2012, %v2005, %v2009
  %v2014 = vand.u32 2147483647, %v2004
  %vm2015 = vcmp.eq.f32.partialorder %v2014, 8.507059e+37
  %v2016 = vand.u32 %v2004, 2147483648
  %v2017 = vor.u32 1.1754944e-38, %v2016
  %v2018 = vsel %vm2015, %v2017, %v2013
  %v2019 = vmul.f32 1.0, %v2018
  %v2020 = vxor.u32 %v1998, 2147483648
  %v2021 = vmul.f32 %v2020, 1.442695
  %v2022 = vpow.pop %v2021
  %v2023 = vadd.f32 %v2022, 1.0
  %v2024 = vrcp.pop %v2023
  %v2025 = vmul.f32 %v2023, %v2024
  %v2026 = vsub.f32 1.0, %v2025
  %v2027 = vmul.f32 %v2024, %v2026
  %v2028 = vadd.f32 %v2024, %v2027
  %vm2029 = vweird.f32 %v2023
  %vm2030 = vweird.f32 %v2024
  %vm2031 = vmor %vm2029, %vm2030
  %v2032 = vsel %vm2031, %v2024, %v2028
  %v2033 = vand.u32 2147483647, %v2023
  %vm2034 = vcmp.eq.f32.partialorder %v2033, 8.507059e+37
  %v2035 = vand.u32 %v2023, 2147483648
  %v2036 = vor.u32 1.1754944e-38, %v2035
  %v2037 = vsel %vm2034, %v2036, %v2032
  %v2038 = vmul.f32 1.0, %v2037
  %v2039 = vtanh.pop %v1999
  %v2040 = vxor.u32 %v2000, 2147483648
  %v2041 = vmul.f32 %v2040, 1.442695
  %v2042 = vpow.pop %v2041
  %v2043 = vadd.f32 %v2042, 1.0
  %v2044 = vrcp.pop %v2043
  %v2045 = vmul.f32 %v2043, %v2044
  %v2046 = vsub.f32 1.0, %v2045
  %v2047 = vmul.f32 %v2044, %v2046
  %v2048 = vadd.f32 %v2044, %v2047
  %vm2049 = vweird.f32 %v2043
  %vm2050 = vweird.f32 %v2044
  %vm2051 = vmor %vm2049, %vm2050
  %v2052 = vsel %vm2051, %v2044, %v2048
  %v2053 = vand.u32 2147483647, %v2043
  %vm2054 = vcmp.eq.f32.partialorder %v2053, 8.507059e+37
  %v2055 = vand.u32 %v2043, 2147483648
  %v2056 = vor.u32 1.1754944e-38, %v2055
  %v2057 = vsel %vm2054, %v2056, %v2052
  %v2058 = vmul.f32 1.0, %v2057
  %v2059 = vmul.f32 %v2038, 0.0
  %v2060 = vmul.f32 %v2019, %v2039
  %v2061 = vadd.f32 %v2059, %v2060
  %v2062 = vtanh.pop %v2061
  %v2063 = vmul.f32 %v2058, %v2062
  %v2064 = vpack.c.bf16 %v2063, %v2063
  %2065 = vmatpush.bf16.msra.mxu0 %v1909
  %2066 = vmatpush.bf16.msra.mxu0 %v1905
  %2067 = vmatpush.bf16.msra.mxu0 %v1901
  %2068 = vmatpush.bf16.msra.mxu0 %v1897
  %2069 = vmatpush.bf16.msra.mxu0 %v1893
  %2070 = vmatpush.bf16.msra.mxu0 %v1889
  %2071 = vmatpush.bf16.msra.mxu0 %v1885
  %2072 = vmatpush.bf16.msra.mxu0 %v1881
  %2073 = vmatmul.bf16.gmra.mxu0 %v2064
  %v2074 = vpop.f32.mrf.mxu0
  %v2075 = vadd.f32 0.0, %v2074
  %v2076 = vpop.f32.mrf.mxu0
  %2077 = vdwg.mxu0
  %2078 = vmatpush.bf16.msra.mxu0 %v1910
  %2079 = vmatpush.bf16.msra.mxu0 %v1906
  %2080 = vmatpush.bf16.msra.mxu0 %v1902
  %2081 = vmatpush.bf16.msra.mxu0 %v1898
  %2082 = vmatpush.bf16.msra.mxu0 %v1894
  %2083 = vmatpush.bf16.msra.mxu0 %v1890
  %2084 = vmatpush.bf16.msra.mxu0 %v1886
  %2085 = vmatpush.bf16.msra.mxu0 %v1882
  %2086 = vmatmul.bf16.gmra.mxu0 %v2064
  %v2087 = vpop.f32.mrf.mxu0
  %v2088 = vadd.f32 0.0, %v2087
  %v2089 = vpop.f32.mrf.mxu0
  %2090 = vdwg.mxu0
  %2091 = vmatpush.bf16.msra.mxu0 %v1911
  %2092 = vmatpush.bf16.msra.mxu0 %v1907
  %2093 = vmatpush.bf16.msra.mxu0 %v1903
  %2094 = vmatpush.bf16.msra.mxu0 %v1899
  %2095 = vmatpush.bf16.msra.mxu0 %v1895
  %2096 = vmatpush.bf16.msra.mxu0 %v1891
  %2097 = vmatpush.bf16.msra.mxu0 %v1887
  %2098 = vmatpush.bf16.msra.mxu0 %v1883
  %2099 = vmatmul.bf16.gmra.mxu0 %v2064
  %v2100 = vpop.f32.mrf.mxu0
  %v2101 = vadd.f32 0.0, %v2100
  %v2102 = vpop.f32.mrf.mxu0
  %2103 = vdwg.mxu0
  %2104 = vmatpush.bf16.msra.mxu0 %v1912
  %2105 = vmatpush.bf16.msra.mxu0 %v1908
  %2106 = vmatpush.bf16.msra.mxu0 %v1904
  %2107 = vmatpush.bf16.msra.mxu0 %v1900
  %2108 = vmatpush.bf16.msra.mxu0 %v1896
  %2109 = vmatpush.bf16.msra.mxu0 %v1892
  %2110 = vmatpush.bf16.msra.mxu0 %v1888
  %2111 = vmatpush.bf16.msra.mxu0 %v1884
  %2112 = vmatmul.bf16.gmra.mxu0 %v2064
  %v2113 = vpop.f32.mrf.mxu0
  %v2114 = vadd.f32 0.0, %v2113
  %v2115 = vpop.f32.mrf.mxu0
  %2116 = vdwg.mxu0
  %v2117 = vadd.f32 %v1741, %v2075
  %v2118 = vadd.f32 %v1742, %v2088
  %v2119 = vadd.f32 %v1743, %v2101
  %v2120 = vadd.f32 %v1744, %v2114
  %v2121 = vxor.u32 %v2117, 2147483648
  %v2122 = vmul.f32 %v2121, 1.442695
  %v2123 = vpow.pop %v2122
  %v2124 = vadd.f32 %v2123, 1.0
  %v2125 = vrcp.pop %v2124
  %v2126 = vmul.f32 %v2124, %v2125
  %v2127 = vsub.f32 1.0, %v2126
  %v2128 = vmul.f32 %v2125, %v2127
  %v2129 = vadd.f32 %v2125, %v2128
  %vm2130 = vweird.f32 %v2124
  %vm2131 = vweird.f32 %v2125
  %vm2132 = vmor %vm2130, %vm2131
  %v2133 = vsel %vm2132, %v2125, %v2129
  %v2134 = vand.u32 2147483647, %v2124
  %vm2135 = vcmp.eq.f32.partialorder %v2134, 8.507059e+37
  %v2136 = vand.u32 %v2124, 2147483648
  %v2137 = vor.u32 1.1754944e-38, %v2136
  %v2138 = vsel %vm2135, %v2137, %v2133
  %v2139 = vmul.f32 1.0, %v2138
  %v2140 = vxor.u32 %v2118, 2147483648
  %v2141 = vmul.f32 %v2140, 1.442695
  %v2142 = vpow.pop %v2141
  %v2143 = vadd.f32 %v2142, 1.0
  %v2144 = vrcp.pop %v2143
  %v2145 = vmul.f32 %v2143, %v2144
  %v2146 = vsub.f32 1.0, %v2145
  %v2147 = vmul.f32 %v2144, %v2146
  %v2148 = vadd.f32 %v2144, %v2147
  %vm2149 = vweird.f32 %v2143
  %vm2150 = vweird.f32 %v2144
  %vm2151 = vmor %vm2149, %vm2150
  %v2152 = vsel %vm2151, %v2144, %v2148
  %v2153 = vand.u32 2147483647, %v2143
  %vm2154 = vcmp.eq.f32.partialorder %v2153, 8.507059e+37
  %v2155 = vand.u32 %v2143, 2147483648
  %v2156 = vor.u32 1.1754944e-38, %v2155
  %v2157 = vsel %vm2154, %v2156, %v2152
  %v2158 = vmul.f32 1.0, %v2157
  %v2159 = vtanh.pop %v2119
  %v2160 = vxor.u32 %v2120, 2147483648
  %v2161 = vmul.f32 %v2160, 1.442695
  %v2162 = vpow.pop %v2161
  %v2163 = vadd.f32 %v2162, 1.0
  %v2164 = vrcp.pop %v2163
  %v2165 = vmul.f32 %v2163, %v2164
  %v2166 = vsub.f32 1.0, %v2165
  %v2167 = vmul.f32 %v2164, %v2166
  %v2168 = vadd.f32 %v2164, %v2167
  %vm2169 = vweird.f32 %v2163
  %vm2170 = vweird.f32 %v2164
  %vm2171 = vmor %vm2169, %vm2170
  %v2172 = vsel %vm2171, %v2164, %v2168
  %v2173 = vand.u32 2147483647, %v2163
  %vm2174 = vcmp.eq.f32.partialorder %v2173, 8.507059e+37
  %v2175 = vand.u32 %v2163, 2147483648
  %v2176 = vor.u32 1.1754944e-38, %v2175
  %v2177 = vsel %vm2174, %v2176, %v2172
  %v2178 = vmul.f32 1.0, %v2177
  %v2179 = vmul.f32 %v2158, %v2061
  %v2180 = vmul.f32 %v2139, %v2159
  %v2181 = vadd.f32 %v2179, %v2180
  %v2182 = vtanh.pop %v2181
  %v2183 = vmul.f32 %v2178, %v2182
  %v2184 = vpack.c.bf16 %v2183, %v2183
  %2185 = vmatpush.bf16.msra.mxu0 %v1909
  %2186 = vmatpush.bf16.msra.mxu0 %v1905
  %2187 = vmatpush.bf16.msra.mxu0 %v1901
  %2188 = vmatpush.bf16.msra.mxu0 %v1897
  %2189 = vmatpush.bf16.msra.mxu0 %v1893
  %2190 = vmatpush.bf16.msra.mxu0 %v1889
  %2191 = vmatpush.bf16.msra.mxu0 %v1885
  %2192 = vmatpush.bf16.msra.mxu0 %v1881
  %2193 = vmatmul.bf16.gmra.mxu0 %v2184
  %v2194 = vpop.f32.mrf.mxu0
  %v2195 = vadd.f32 0.0, %v2194
  %v2196 = vpop.f32.mrf.mxu0
  %2197 = vdwg.mxu0
  %2198 = vmatpush.bf16.msra.mxu0 %v1910
  %2199 = vmatpush.bf16.msra.mxu0 %v1906
  %2200 = vmatpush.bf16.msra.mxu0 %v1902
  %2201 = vmatpush.bf16.msra.mxu0 %v1898
  %2202 = vmatpush.bf16.msra.mxu0 %v1894
  %2203 = vmatpush.bf16.msra.mxu0 %v1890
  %2204 = vmatpush.bf16.msra.mxu0 %v1886
  %2205 = vmatpush.bf16.msra.mxu0 %v1882
  %2206 = vmatmul.bf16.gmra.mxu0 %v2184
  %v2207 = vpop.f32.mrf.mxu0
  %v2208 = vadd.f32 0.0, %v2207
  %v2209 = vpop.f32.mrf.mxu0
  %2210 = vdwg.mxu0
  %2211 = vmatpush.bf16.msra.mxu0 %v1911
  %2212 = vmatpush.bf16.msra.mxu0 %v1907
  %2213 = vmatpush.bf16.msra.mxu0 %v1903
  %2214 = vmatpush.bf16.msra.mxu0 %v1899
  %2215 = vmatpush.bf16.msra.mxu0 %v1895
  %2216 = vmatpush.bf16.msra.mxu0 %v1891
  %2217 = vmatpush.bf16.msra.mxu0 %v1887
  %2218 = vmatpush.bf16.msra.mxu0 %v1883
  %2219 = vmatmul.bf16.gmra.mxu0 %v2184
  %v2220 = vpop.f32.mrf.mxu0
  %v2221 = vadd.f32 0.0, %v2220
  %v2222 = vpop.f32.mrf.mxu0
  %2223 = vdwg.mxu0
  %2224 = vmatpush.bf16.msra.mxu0 %v1912
  %2225 = vmatpush.bf16.msra.mxu0 %v1908
  %2226 = vmatpush.bf16.msra.mxu0 %v1904
  %2227 = vmatpush.bf16.msra.mxu0 %v1900
  %2228 = vmatpush.bf16.msra.mxu0 %v1896
  %2229 = vmatpush.bf16.msra.mxu0 %v1892
  %2230 = vmatpush.bf16.msra.mxu0 %v1888
  %2231 = vmatpush.bf16.msra.mxu0 %v1884
  %2232 = vmatmul.bf16.gmra.mxu0 %v2184
  %v2233 = vpop.f32.mrf.mxu0
  %v2234 = vadd.f32 0.0, %v2233
  %v2235 = vpop.f32.mrf.mxu0
  %2236 = vdwg.mxu0
  %v2237 = vadd.f32 %v1745, %v2195
  %v2238 = vadd.f32 %v1746, %v2208
  %v2239 = vadd.f32 %v1747, %v2221
  %v2240 = vadd.f32 %v1748, %v2234
  %v2241 = vxor.u32 %v2237, 2147483648
  %v2242 = vmul.f32 %v2241, 1.442695
  %v2243 = vpow.pop %v2242
  %v2244 = vadd.f32 %v2243, 1.0
  %v2245 = vrcp.pop %v2244
  %v2246 = vmul.f32 %v2244, %v2245
  %v2247 = vsub.f32 1.0, %v2246
  %v2248 = vmul.f32 %v2245, %v2247
  %v2249 = vadd.f32 %v2245, %v2248
  %vm2250 = vweird.f32 %v2244
  %vm2251 = vweird.f32 %v2245
  %vm2252 = vmor %vm2250, %vm2251
  %v2253 = vsel %vm2252, %v2245, %v2249
  %v2254 = vand.u32 2147483647, %v2244
  %vm2255 = vcmp.eq.f32.partialorder %v2254, 8.507059e+37
  %v2256 = vand.u32 %v2244, 2147483648
  %v2257 = vor.u32 1.1754944e-38, %v2256
  %v2258 = vsel %vm2255, %v2257, %v2253
  %v2259 = vmul.f32 1.0, %v2258
  %v2260 = vxor.u32 %v2238, 2147483648
  %v2261 = vmul.f32 %v2260, 1.442695
  %v2262 = vpow.pop %v2261
  %v2263 = vadd.f32 %v2262, 1.0
  %v2264 = vrcp.pop %v2263
  %v2265 = vmul.f32 %v2263, %v2264
  %v2266 = vsub.f32 1.0, %v2265
  %v2267 = vmul.f32 %v2264, %v2266
  %v2268 = vadd.f32 %v2264, %v2267
  %vm2269 = vweird.f32 %v2263
  %vm2270 = vweird.f32 %v2264
  %vm2271 = vmor %vm2269, %vm2270
  %v2272 = vsel %vm2271, %v2264, %v2268
  %v2273 = vand.u32 2147483647, %v2263
  %vm2274 = vcmp.eq.f32.partialorder %v2273, 8.507059e+37
  %v2275 = vand.u32 %v2263, 2147483648
  %v2276 = vor.u32 1.1754944e-38, %v2275
  %v2277 = vsel %vm2274, %v2276, %v2272
  %v2278 = vmul.f32 1.0, %v2277
  %v2279 = vtanh.pop %v2239
  %v2280 = vxor.u32 %v2240, 2147483648
  %v2281 = vmul.f32 %v2280, 1.442695
  %v2282 = vpow.pop %v2281
  %v2283 = vadd.f32 %v2282, 1.0
  %v2284 = vrcp.pop %v2283
  %v2285 = vmul.f32 %v2283, %v2284
  %v2286 = vsub.f32 1.0, %v2285
  %v2287 = vmul.f32 %v2284, %v2286
  %v2288 = vadd.f32 %v2284, %v2287
  %vm2289 = vweird.f32 %v2283
  %vm2290 = vweird.f32 %v2284
  %vm2291 = vmor %vm2289, %vm2290
  %v2292 = vsel %vm2291, %v2284, %v2288
  %v2293 = vand.u32 2147483647, %v2283
  %vm2294 = vcmp.eq.f32.partialorder %v2293, 8.507059e+37
  %v2295 = vand.u32 %v2283, 2147483648
  %v2296 = vor.u32 1.1754944e-38, %v2295
  %v2297 = vsel %vm2294, %v2296, %v2292
  %v2298 = vmul.f32 1.0, %v2297
  %v2299 = vmul.f32 %v2278, %v2181
  %v2300 = vmul.f32 %v2259, %v2279
  %v2301 = vadd.f32 %v2299, %v2300
  %v2302 = vtanh.pop %v2301
  %v2303 = vmul.f32 %v2298, %v2302
  %v2304 = vpack.c.bf16 %v2303, %v2303
  %2305 = vmatpush.bf16.msra.mxu0 %v1909
  %2306 = vmatpush.bf16.msra.mxu0 %v1905
  %2307 = vmatpush.bf16.msra.mxu0 %v1901
  %2308 = vmatpush.bf16.msra.mxu0 %v1897
  %2309 = vmatpush.bf16.msra.mxu0 %v1893
  %2310 = vmatpush.bf16.msra.mxu0 %v1889
  %2311 = vmatpush.bf16.msra.mxu0 %v1885
  %2312 = vmatpush.bf16.msra.mxu0 %v1881
  %2313 = vmatmul.bf16.gmra.mxu0 %v2304
  %v2314 = vpop.f32.mrf.mxu0
  %v2315 = vadd.f32 0.0, %v2314
  %v2316 = vpop.f32.mrf.mxu0
  %2317 = vdwg.mxu0
  %2318 = vmatpush.bf16.msra.mxu0 %v1910
  %2319 = vmatpush.bf16.msra.mxu0 %v1906
  %2320 = vmatpush.bf16.msra.mxu0 %v1902
  %2321 = vmatpush.bf16.msra.mxu0 %v1898
  %2322 = vmatpush.bf16.msra.mxu0 %v1894
  %2323 = vmatpush.bf16.msra.mxu0 %v1890
  %2324 = vmatpush.bf16.msra.mxu0 %v1886
  %2325 = vmatpush.bf16.msra.mxu0 %v1882
  %2326 = vmatmul.bf16.gmra.mxu0 %v2304
  %v2327 = vpop.f32.mrf.mxu0
  %v2328 = vadd.f32 0.0, %v2327
  %v2329 = vpop.f32.mrf.mxu0
  %2330 = vdwg.mxu0
  %2331 = vmatpush.bf16.msra.mxu0 %v1911
  %2332 = vmatpush.bf16.msra.mxu0 %v1907
  %2333 = vmatpush.bf16.msra.mxu0 %v1903
  %2334 = vmatpush.bf16.msra.mxu0 %v1899
  %2335 = vmatpush.bf16.msra.mxu0 %v1895
  %2336 = vmatpush.bf16.msra.mxu0 %v1891
  %2337 = vmatpush.bf16.msra.mxu0 %v1887
  %2338 = vmatpush.bf16.msra.mxu0 %v1883
  %2339 = vmatmul.bf16.gmra.mxu0 %v2304
  %v2340 = vpop.f32.mrf.mxu0
  %v2341 = vadd.f32 0.0, %v2340
  %v2342 = vpop.f32.mrf.mxu0
  %2343 = vdwg.mxu0
  %2344 = vmatpush.bf16.msra.mxu0 %v1912
  %2345 = vmatpush.bf16.msra.mxu0 %v1908
  %2346 = vmatpush.bf16.msra.mxu0 %v1904
  %2347 = vmatpush.bf16.msra.mxu0 %v1900
  %2348 = vmatpush.bf16.msra.mxu0 %v1896
  %2349 = vmatpush.bf16.msra.mxu0 %v1892
  %2350 = vmatpush.bf16.msra.mxu0 %v1888
  %2351 = vmatpush.bf16.msra.mxu0 %v1884
  %2352 = vmatmul.bf16.gmra.mxu0 %v2304
  %v2353 = vpop.f32.mrf.mxu0
  %v2354 = vadd.f32 0.0, %v2353
  %v2355 = vpop.f32.mrf.mxu0
  %2356 = vdwg.mxu0
  %v2357 = vadd.f32 %v1749, %v2315
  %v2358 = vadd.f32 %v1750, %v2328
  %v2359 = vadd.f32 %v1751, %v2341
  %v2360 = vadd.f32 %v1752, %v2354
  %v2361 = vxor.u32 %v2357, 2147483648
  %v2362 = vmul.f32 %v2361, 1.442695
  %v2363 = vpow.pop %v2362
  %v2364 = vadd.f32 %v2363, 1.0
  %v2365 = vrcp.pop %v2364
  %v2366 = vmul.f32 %v2364, %v2365
  %v2367 = vsub.f32 1.0, %v2366
  %v2368 = vmul.f32 %v2365, %v2367
  %v2369 = vadd.f32 %v2365, %v2368
  %vm2370 = vweird.f32 %v2364
  %vm2371 = vweird.f32 %v2365
  %vm2372 = vmor %vm2370, %vm2371
  %v2373 = vsel %vm2372, %v2365, %v2369
  %v2374 = vand.u32 2147483647, %v2364
  %vm2375 = vcmp.eq.f32.partialorder %v2374, 8.507059e+37
  %v2376 = vand.u32 %v2364, 2147483648
  %v2377 = vor.u32 1.1754944e-38, %v2376
  %v2378 = vsel %vm2375, %v2377, %v2373
  %v2379 = vmul.f32 1.0, %v2378
  %v2380 = vxor.u32 %v2358, 2147483648
  %v2381 = vmul.f32 %v2380, 1.442695
  %v2382 = vpow.pop %v2381
  %v2383 = vadd.f32 %v2382, 1.0
  %v2384 = vrcp.pop %v2383
  %v2385 = vmul.f32 %v2383, %v2384
  %v2386 = vsub.f32 1.0, %v2385
  %v2387 = vmul.f32 %v2384, %v2386
  %v2388 = vadd.f32 %v2384, %v2387
  %vm2389 = vweird.f32 %v2383
  %vm2390 = vweird.f32 %v2384
  %vm2391 = vmor %vm2389, %vm2390
  %v2392 = vsel %vm2391, %v2384, %v2388
  %v2393 = vand.u32 2147483647, %v2383
  %vm2394 = vcmp.eq.f32.partialorder %v2393, 8.507059e+37
  %v2395 = vand.u32 %v2383, 2147483648
  %v2396 = vor.u32 1.1754944e-38, %v2395
  %v2397 = vsel %vm2394, %v2396, %v2392
  %v2398 = vmul.f32 1.0, %v2397
  %v2399 = vtanh.pop %v2359
  %v2400 = vxor.u32 %v2360, 2147483648
  %v2401 = vmul.f32 %v2400, 1.442695
  %v2402 = vpow.pop %v2401
  %v2403 = vadd.f32 %v2402, 1.0
  %v2404 = vrcp.pop %v2403
  %v2405 = vmul.f32 %v2403, %v2404
  %v2406 = vsub.f32 1.0, %v2405
  %v2407 = vmul.f32 %v2404, %v2406
  %v2408 = vadd.f32 %v2404, %v2407
  %vm2409 = vweird.f32 %v2403
  %vm2410 = vweird.f32 %v2404
  %vm2411 = vmor %vm2409, %vm2410
  %v2412 = vsel %vm2411, %v2404, %v2408
  %v2413 = vand.u32 2147483647, %v2403
  %vm2414 = vcmp.eq.f32.partialorder %v2413, 8.507059e+37
  %v2415 = vand.u32 %v2403, 2147483648
  %v2416 = vor.u32 1.1754944e-38, %v2415
  %v2417 = vsel %vm2414, %v2416, %v2412
  %v2418 = vmul.f32 1.0, %v2417
  %v2419 = vmul.f32 %v2398, %v2301
  %v2420 = vmul.f32 %v2379, %v2399
  %v2421 = vadd.f32 %v2419, %v2420
  %v2422 = vtanh.pop %v2421
  %v2423 = vmul.f32 %v2418, %v2422
  %v2424 = vtanh.pop %v2423
  %v2425 = vpack.c.bf16 %v2424, %v2424
  %v2426 = vld [vmem:[%s5] sm:$0xf]
  %v2427 = vld [vmem:[%s5 + $0x4] sm:$0xf]
  %v2428 = vld [vmem:[%s5 + $0x8] sm:$0xf]
  %v2429 = vld [vmem:[%s5 + $0xc] sm:$0xf]
  %v2430 = vld [vmem:[%s5 + $0x10] sm:$0xf]
  %v2431 = vld [vmem:[%s5 + $0x14] sm:$0xf]
  %v2432 = vld [vmem:[%s5 + $0x18] sm:$0xf]
  %v2433 = vld [vmem:[%s5 + $0x1c] sm:$0xf]
  %v2434 = vld [vmem:[%s5 + $0x20] sm:$0xf]
  %v2435 = vld [vmem:[%s5 + $0x24] sm:$0xf]
  %v2436 = vld [vmem:[%s5 + $0x28] sm:$0xf]
  %v2437 = vld [vmem:[%s5 + $0x2c] sm:$0xf]
  %v2438 = vld [vmem:[%s5 + $0x30] sm:$0xf]
  %v2439 = vld [vmem:[%s5 + $0x34] sm:$0xf]
  %v2440 = vld [vmem:[%s5 + $0x38] sm:$0xf]
  %v2441 = vld [vmem:[%s5 + $0x3c] sm:$0xf]
  %v2442 = vperm.slane %v30, 7
  %v2459 = vunpack.c.l.b16 %v2426
  %v2460 = vunpack.c.l.b16 %v2427
  %v2461 = vunpack.c.l.b16 %v2428
  %v2462 = vunpack.c.l.b16 %v2429
  %v2463 = vunpack.c.l.b16 %v2430
  %v2464 = vunpack.c.l.b16 %v2431
  %v2465 = vunpack.c.l.b16 %v2432
  %v2466 = vunpack.c.l.b16 %v2433
  %v2467 = vunpack.c.l.b16 %v2434
  %v2468 = vunpack.c.l.b16 %v2435
  %v2469 = vunpack.c.l.b16 %v2436
  %v2470 = vunpack.c.l.b16 %v2437
  %v2471 = vunpack.c.l.b16 %v2438
  %v2472 = vunpack.c.l.b16 %v2439
  %v2473 = vunpack.c.l.b16 %v2440
  %v2474 = vunpack.c.l.b16 %v2441
  %v2475 = vpack.c.b16 %v2460, %v2459
  %v2476 = vpack.c.b16 %v2462, %v2461
  %v2477 = vpack.c.b16 %v2464, %v2463
  %v2478 = vpack.c.b16 %v2466, %v2465
  %v2479 = vpack.c.b16 %v2468, %v2467
  %v2480 = vpack.c.b16 %v2470, %v2469
  %v2481 = vpack.c.b16 %v2472, %v2471
  %v2482 = vpack.c.b16 %v2474, %v2473
  %2491 = vmatpush.bf16.msra.mxu0 %v2482
  %2492 = vmatpush.bf16.msra.mxu0 %v2481
  %2493 = vmatpush.bf16.msra.mxu0 %v2480
  %2494 = vmatpush.bf16.msra.mxu0 %v2479
  %2495 = vmatpush.bf16.msra.mxu0 %v2478
  %2496 = vmatpush.bf16.msra.mxu0 %v2477
  %2497 = vmatpush.bf16.msra.mxu0 %v2476
  %2498 = vmatpush.bf16.msra.mxu0 %v2475
  %2499 = vmatmul.bf16.gmra.mxu0 %v2425
  %v2500 = vpop.f32.mrf.mxu0
  %v2501 = vadd.f32 %v2442, %v2500
  %v2502 = vpop.f32.mrf.mxu0
  %2503 = vdwg.mxu0
  %v2504 = vmax.f32 %v2501, 0.0
  %v2505 = vpack.c.bf16 %v2504, %v2504
  %v2506 = vld [vmem:[%s6] sm:$0xf]
  %v2507 = vld [vmem:[%s6 + $0x4] sm:$0xf]
  %v2508 = vld [vmem:[%s6 + $0x8] sm:$0xf]
  %v2509 = vld [vmem:[%s6 + $0xc] sm:$0xf]
  %v2510 = vperm.slane %v34, 0
  %v2515 = vunpack.c.l.b16 %v2506
  %v2516 = vunpack.c.l.b16 %v2507
  %v2517 = vunpack.c.l.b16 %v2508
  %v2518 = vunpack.c.l.b16 %v2509
  %v2519 = vpack.c.b16 %v2516, %v2515
  %v2520 = vpack.c.b16 %v2518, %v2517
  %vm2523 = vcmask 261120
  %v2525 = vsel %vm2523, %v2505, 0
  %2527 = vmatpush.bf16.msra.mxu0 0
  %2528 = vmatpush.bf16.msra.mxu0 0
  %2529 = vmatpush.bf16.msra.mxu0 0
  %2530 = vmatpush.bf16.msra.mxu0 0
  %2531 = vmatpush.bf16.msra.mxu0 0
  %2532 = vmatpush.bf16.msra.mxu0 0
  %2533 = vmatpush.bf16.msra.mxu0 %v2520
  %2534 = vmatpush.bf16.msra.mxu0 %v2519
  %2535 = vmatmul.bf16.gmra.mxu0 %v2525
  %v2536 = vpop.f32.mrf.mxu0
  %v2537 = vadd.f32 %v2510, %v2536
  %v2538 = vpop.f32.mrf.mxu0
  %2539 = vdwg.mxu0
  %2540 = vst [vmem:[%s8] sm:$0xff] %v2537
  // Predicated region
  $region34: #{lopez17_forward.1} parent=0 // pred_check
    _
  $region35: #{lopez17_forward.1} parent=0 // pred_check_branch
    %2542 = sbr.rel (0) target = $region37
  $region36: #{lopez17_forward.1} parent=0 // pred_region
    _
  $region37: #{lopez17_forward.1} parent=0 // pred_fallthru
    _
  // Predicated region
  $region38: #{lopez17_forward.1} parent=0 // pred_check
    _
  $region39: #{lopez17_forward.1} parent=0 // pred_check_branch
    %2544 = sbr.rel (0) target = $region41
  $region40: #{lopez17_forward.1} parent=0 // pred_region
    _
  $region41: #{lopez17_forward.1} parent=0 // pred_fallthru
    _

</llo_original>
